<compile_context>
chip_gen: v5e
topology: v5e:2x2
jax: 0.10.0
libtpu: 0.0.40
codegen_flags: <defaults>
</compile_context>

<pallas_src>
import numpy as np
import jax
import jax.numpy as jnp
from jax.experimental import pallas as pl
from jax.experimental.pallas import tpu as pltpu


# ----------------------------------------------------------------------------
# Pallas kernel: single grid step, fully unrolled (static) time loop over both
# LSTM layers, FC head at the end.
# ----------------------------------------------------------------------------
def lstm_fc_kernel(x_ref, wih0_ref, whh0_ref, b0_ref,
                   wih1_ref, whh1_ref, b1_ref, h0_ref, c0_ref,
                   wfc_ref, bfc_ref, out_ref):
    TB = x_ref.shape[0]
    H = whh0_ref.shape[0]          # hidden size (weights pre-transposed to (H, 4H))
    G = 4 * H
    B = h0_ref.shape[1]
    T = TB // B
    f32 = jnp.float32

    # ---- hoisted layer-0 input projection: ONE (B*T, F) @ (F, 4H) matmul for
    # all timesteps, bias (bih0 + bhh0) folded in, kept as an SSA value
    # (no VMEM scratch round-trip).
    gproj = (jnp.dot(x_ref[...], wih0_ref[...], preferred_element_type=f32)
             + b0_ref[...])

    # Per-step (B, 4H) gate slabs with STATIC row indices. x is in its natural
    # view(-1, 400) b-major order, so batch b / time t lives at row b*T + t.
    # This reorder touches ~4 KB and sits off the recurrence critical path.
    g_steps = [
        jnp.concatenate(
            [gproj[b * T + t:b * T + t + 1, :] for b in range(B)], axis=0)
        for t in range(T)
    ]

    # ---- hoist weight loads / bias / gate-fixup broadcasts above the loop
    # (JAX does not CSE broadcast_in_dim inside loop bodies).
    whh0 = whh0_ref[...]                               # (H, 4H)
    wih1 = wih1_ref[...]                               # (H, 4H)
    whh1 = whh1_ref[...]                               # (H, 4H)
    b1 = jnp.broadcast_to(b1_ref[...], (B, G))         # (B, 4H)

    # Gate order is PyTorch's (i, f, g, o). The i/f/o columns were pre-scaled
    # by 0.5 in the wrapper, so a single tanh over all 4H lanes plus a per-lane
    # affine fixup yields sigmoid(z) = 0.5*tanh(z/2) + 0.5 on those lanes and a
    # plain tanh on the g lanes: one EUP op per cell instead of two.
    lane = jax.lax.broadcasted_iota(jnp.int32, (B, G), 1)
    is_g_lane = (lane >= 2 * H) & (lane < 3 * H)
    gate_mul = jnp.where(is_g_lane, 1.0, 0.5).astype(f32)
    gate_off = jnp.where(is_g_lane, 0.0, 0.5).astype(f32)

    def activate(gates):
        a = jnp.tanh(gates) * gate_mul + gate_off      # 1 EUP + cheap VPU fixup
        return a[:, :H], a[:, H:2 * H], a[:, 2 * H:3 * H], a[:, 3 * H:]

    h0, c0 = h0_ref[0], c0_ref[0]
    h1, c1 = h0_ref[1], c0_ref[1]

    # Fully unrolled static time loop (T is tiny, everything stays in vregs).
    for t in range(T):
        # -- layer-1 recurrent half first: depends only on h1(t-1), so it
        # issues off the dependent chain of this step.
        r1 = jnp.dot(h1, whh1, preferred_element_type=f32) + b1
        # -- layer 0: only the recurrent matmul is on the per-step path.
        gates0 = g_steps[t] + jnp.dot(h0, whh0, preferred_element_type=f32)
        i0, f0, g0, o0 = activate(gates0)
        c0 = f0 * c0 + i0 * g0
        h0 = o0 * jnp.tanh(c0)
        # (dropout between layers skipped — eval semantics)
        # -- layer 1 dependent half.
        gates1 = jnp.dot(h0, wih1, preferred_element_type=f32) + r1
        i1, f1, g1, o1 = activate(gates1)
        c1 = f1 * c1 + i1 * g1
        h1 = o1 * jnp.tanh(c1)

    # out = fc1(out[:, -1, :])
    out_ref[...] = (jnp.dot(h1, wfc_ref[...], preferred_element_type=f32)
                    + bfc_ref[...]).astype(out_ref.dtype)


# ----------------------------------------------------------------------------
# Wrapper: parameter plumbing (gate pre-scaling, transposes) + pallas_call
# ----------------------------------------------------------------------------
def rnn_d_forward(x, params):
    L, B, H = params["h0"].shape
    F = params["wih0"].shape[1]
    C = params["wfc"].shape[0]
    G = 4 * H

    # Mirror `x = x.view(-1, 400)`; keep the natural b-major row order (no
    # wrapper-side transpose dispatch — the kernel re-orders the 4 KB
    # projection result instead of the 25 KB input).
    x2 = x.reshape(-1, F)
    T = x2.shape[0] // B

    # Pre-scale the sigmoid-gate (i, f, o) rows/biases by 0.5 so the kernel
    # needs only ONE tanh per cell (sigmoid(z) = 0.5*tanh(z/2) + 0.5).
    ones_h = jnp.ones((H,), jnp.float32)
    col_scale = jnp.concatenate([0.5 * ones_h, 0.5 * ones_h,      # i, f
                                 ones_h, 0.5 * ones_h])           # g, o

    def prep_w(w):                       # (4H, in) PyTorch layout -> (in, 4H)
        return (w * col_scale[:, None]).T

    wih0_T = prep_w(params["wih0"])                                   # (F, 4H)
    whh0_T = prep_w(params["whh0"])                                   # (H, 4H)
    b0 = ((params["bih0"] + params["bhh0"]) * col_scale).reshape(1, G)
    wih1_T = prep_w(params["wih1"])                                   # (H, 4H)
    whh1_T = prep_w(params["whh1"])                                   # (H, 4H)
    b1 = ((params["bih1"] + params["bhh1"]) * col_scale).reshape(1, G)
    wfc_T = params["wfc"].T                                           # (H, C)
    bfc = params["bfc"].reshape(1, C)                                 # (1, C)

    grid_spec = pltpu.PrefetchScalarGridSpec(
        num_scalar_prefetch=0,
        grid=(1,),                                   # single step; time loop is
        in_specs=[                                   # unrolled inside the kernel
            pl.BlockSpec((T * B, F), lambda i: (0, 0)),      # x (natural layout)
            pl.BlockSpec((F, G), lambda i: (0, 0)),          # W_ih layer0 ^T
            pl.BlockSpec((H, G), lambda i: (0, 0)),          # W_hh layer0 ^T
            pl.BlockSpec((1, G), lambda i: (0, 0)),          # bias layer0
            pl.BlockSpec((H, G), lambda i: (0, 0)),          # W_ih layer1 ^T
            pl.BlockSpec((H, G), lambda i: (0, 0)),          # W_hh layer1 ^T
            pl.BlockSpec((1, G), lambda i: (0, 0)),          # bias layer1
            pl.BlockSpec((L, B, H), lambda i: (0, 0, 0)),    # h0 param
            pl.BlockSpec((L, B, H), lambda i: (0, 0, 0)),    # c0 param
            pl.BlockSpec((H, C), lambda i: (0, 0)),          # fc weight ^T
            pl.BlockSpec((1, C), lambda i: (0, 0)),          # fc bias
        ],
        out_specs=pl.BlockSpec((B, C), lambda i: (0, 0)),
    )

    return pl.pallas_call(
        lstm_fc_kernel,
        out_shape=jax.ShapeDtypeStruct((B, C), jnp.float32),
        grid_spec=grid_spec,
        compiler_params=pltpu.CompilerParams(
            dimension_semantics=("arbitrary",)),
    )(x2, wih0_T, whh0_T, b0, wih1_T, whh1_T, b1,
      params["h0"], params["c0"], wfc_T, bfc)


# ----------------------------------------------------------------------------
# Deterministic parameter init (matches shapes/init style of RNN_D.__init__)
# ----------------------------------------------------------------------------
def init_params(key, input_size, hidden_size, num_layers, batch_size, num_classes):
    k = 1.0 / np.sqrt(hidden_size)
    keys = jax.random.split(key, 10)

    def u(kk, shape):
        return jax.random.uniform(kk, shape, jnp.float32, -k, k)

    params = {
        # LSTM layer 0 (input_size -> hidden)
        "wih0": u(keys[0], (4 * hidden_size, input_size)),
        "whh0": u(keys[1], (4 * hidden_size, hidden_size)),
        "bih0": u(keys[2], (4 * hidden_size,)),
        "bhh0": u(keys[3], (4 * hidden_size,)),
        # LSTM layer 1 (hidden -> hidden)
        "wih1": u(keys[4], (4 * hidden_size, hidden_size)),
        "whh1": u(keys[5], (4 * hidden_size, hidden_size)),
        "bih1": u(keys[6], (4 * hidden_size,)),
        "bhh1": u(keys[7], (4 * hidden_size,)),
        # fc1: kaiming_normal_ weight, default uniform bias
        "wfc": jax.random.normal(keys[8], (num_classes, hidden_size), jnp.float32)
                * np.sqrt(2.0 / hidden_size),
        "bfc": jax.random.uniform(keys[9], (num_classes,), jnp.float32, -k, k),
        # learned initial states (zeros at init, as in the PyTorch Parameters)
        "h0": jnp.zeros((num_layers, batch_size, hidden_size), jnp.float32),
        "c0": jnp.zeros((num_layers, batch_size, hidden_size), jnp.float32),
    }
    return params


# ----------------------------------------------------------------------------
# Pure-JAX reference (correctness check against PyTorch LSTM math)
# ----------------------------------------------------------------------------
def reference_forward(x, params):
    B = params["h0"].shape[1]
    F = params["wih0"].shape[1]
    x2 = x.reshape(-1, F)
    T = x2.shape[0] // B
    xs = jnp.transpose(x2.reshape(B, T, F), (1, 0, 2))  # (T, B, F)

    hp = jax.lax.Precision.HIGHEST

    def cell(x_t, h, c, wih, whh, bih, bhh):
        gates = (jnp.dot(x_t, wih.T, precision=hp)
                 + jnp.dot(h, whh.T, precision=hp) + bih + bhh)
        i, f, g, o = jnp.split(gates, 4, axis=-1)
        c = jax.nn.sigmoid(f) * c + jax.nn.sigmoid(i) * jnp.tanh(g)
        h = jax.nn.sigmoid(o) * jnp.tanh(c)
        return h, c

    def step(carry, x_t):
        h0, c0, h1, c1 = carry
        h0, c0 = cell(x_t, h0, c0, params["wih0"], params["whh0"],
                      params["bih0"], params["bhh0"])
        h1, c1 = cell(h0, h1, c1, params["wih1"], params["whh1"],
                      params["bih1"], params["bhh1"])
        return (h0, c0, h1, c1), h1

    carry0 = (params["h0"][0], params["c0"][0], params["h0"][1], params["c0"][1])
    _, outs = jax.lax.scan(step, carry0, xs)
    h_last = outs[-1]
    return jnp.dot(h_last, params["wfc"].T, precision=hp) + params["bfc"]


if __name__ == "__main__":
    # Small shapes consistent with forward(): feature size fixed to 400 by
    # x.view(-1, 400); batch=2, seq=8, hidden=16, num_layers=2, num_classes=6.
    B, T, F, H, L, C = 2, 8, 400, 16, 2, 6

    key = jax.random.PRNGKey(0)
    kx, kp = jax.random.split(key)
    params = init_params(kp, input_size=F, hidden_size=H, num_layers=L,
                         batch_size=B, num_classes=C)
    x = jax.random.normal(kx, (B, T, F), jnp.float32)

    out = rnn_d_forward(x, params)
    out = jax.block_until_ready(out)

    ref = reference_forward(x, params)
    # Tolerance tightened from 1e-2 (all-f32 kernel vs HIGHEST-precision ref).
    np.testing.assert_allclose(np.asarray(out), np.asarray(ref),
                               rtol=1e-4, atol=1e-4)
    print("KERNEL_OK")
</pallas_src>

<mosaic_0001>
module attributes {stable_mosaic.version = 11 : i64} {
  func.func @lstm_fc_kernel(%arg0: i32, %arg1: memref<16x400xf32, #tpu.memory_space<vmem>>, %arg2: memref<400x64xf32, #tpu.memory_space<vmem>>, %arg3: memref<16x64xf32, #tpu.memory_space<vmem>>, %arg4: memref<1x64xf32, #tpu.memory_space<vmem>>, %arg5: memref<16x64xf32, #tpu.memory_space<vmem>>, %arg6: memref<16x64xf32, #tpu.memory_space<vmem>>, %arg7: memref<1x64xf32, #tpu.memory_space<vmem>>, %arg8: memref<2x2x16xf32, #tpu.memory_space<vmem>>, %arg9: memref<2x2x16xf32, #tpu.memory_space<vmem>>, %arg10: memref<16x6xf32, #tpu.memory_space<vmem>>, %arg11: memref<1x6xf32, #tpu.memory_space<vmem>>, %arg12: memref<2x6xf32, #tpu.memory_space<vmem>>) attributes {dimension_semantics = [#tpu.dimension_semantics<arbitrary>], iteration_bounds = array<i64: 1>, scalar_prefetch = 0 : i64, scratch_operands = 0 : i64, tpu.core_type = #tpu.core_type<tc>, window_params = [{pipeline_mode = #tpu.pipeline_mode<synchronous>, transform_indices = @transform_0, window_bounds = array<i64: 16, 400>}, {pipeline_mode = #tpu.pipeline_mode<synchronous>, transform_indices = @transform_1, window_bounds = array<i64: 400, 64>}, {pipeline_mode = #tpu.pipeline_mode<synchronous>, transform_indices = @transform_2, window_bounds = array<i64: 16, 64>}, {pipeline_mode = #tpu.pipeline_mode<synchronous>, transform_indices = @transform_3, window_bounds = array<i64: 1, 64>}, {pipeline_mode = #tpu.pipeline_mode<synchronous>, transform_indices = @transform_4, window_bounds = array<i64: 16, 64>}, {pipeline_mode = #tpu.pipeline_mode<synchronous>, transform_indices = @transform_5, window_bounds = array<i64: 16, 64>}, {pipeline_mode = #tpu.pipeline_mode<synchronous>, transform_indices = @transform_6, window_bounds = array<i64: 1, 64>}, {pipeline_mode = #tpu.pipeline_mode<synchronous>, transform_indices = @transform_7, window_bounds = array<i64: 2, 2, 16>}, {pipeline_mode = #tpu.pipeline_mode<synchronous>, transform_indices = @transform_8, window_bounds = array<i64: 2, 2, 16>}, {pipeline_mode = #tpu.pipeline_mode<synchronous>, transform_indices = @transform_9, window_bounds = array<i64: 16, 6>}, {pipeline_mode = #tpu.pipeline_mode<synchronous>, transform_indices = @transform_10, window_bounds = array<i64: 1, 6>}, {pipeline_mode = #tpu.pipeline_mode<synchronous>, transform_indices = @transform_11, window_bounds = array<i64: 2, 6>}]} {
    %c0 = arith.constant 0 : index
    %c0_0 = arith.constant 0 : index
    %0 = vector.load %arg1[%c0, %c0_0] : memref<16x400xf32, #tpu.memory_space<vmem>>, vector<16x400xf32>
    %c0_1 = arith.constant 0 : index
    %c0_2 = arith.constant 0 : index
    %1 = vector.load %arg2[%c0_1, %c0_2] : memref<400x64xf32, #tpu.memory_space<vmem>>, vector<400x64xf32>
    %cst = arith.constant dense<0.000000e+00> : vector<16x64xf32>
    %2 = tpu.matmul %0, %1, %cst {dimension_numbers = #tpu.dot_dimension_numbers<[1], [0], [0], [1], [0, 0, 1, 1], [], []>} : vector<16x400xf32>, vector<400x64xf32>, vector<16x64xf32> -> vector<16x64xf32>
    %c0_3 = arith.constant 0 : index
    %c0_4 = arith.constant 0 : index
    %3 = vector.load %arg4[%c0_3, %c0_4] : memref<1x64xf32, #tpu.memory_space<vmem>>, vector<1x64xf32>
    %4 = vector.broadcast %3 : vector<1x64xf32> to vector<16x64xf32>
    %5 = arith.addf %2, %4 : vector<16x64xf32>
    %6 = vector.extract_strided_slice %5 {offsets = [0, 0], sizes = [1, 64], strides = [1, 1]} : vector<16x64xf32> to vector<1x64xf32>
    %7 = vector.extract_strided_slice %5 {offsets = [8, 0], sizes = [1, 64], strides = [1, 1]} : vector<16x64xf32> to vector<1x64xf32>
    %8 = tpu.concatenate %6, %7 in 0 : vector<1x64xf32>, vector<1x64xf32> -> vector<2x64xf32>
    %9 = vector.extract_strided_slice %5 {offsets = [1, 0], sizes = [1, 64], strides = [1, 1]} : vector<16x64xf32> to vector<1x64xf32>
    %10 = vector.extract_strided_slice %5 {offsets = [9, 0], sizes = [1, 64], strides = [1, 1]} : vector<16x64xf32> to vector<1x64xf32>
    %11 = tpu.concatenate %9, %10 in 0 : vector<1x64xf32>, vector<1x64xf32> -> vector<2x64xf32>
    %12 = vector.extract_strided_slice %5 {offsets = [2, 0], sizes = [1, 64], strides = [1, 1]} : vector<16x64xf32> to vector<1x64xf32>
    %13 = vector.extract_strided_slice %5 {offsets = [10, 0], sizes = [1, 64], strides = [1, 1]} : vector<16x64xf32> to vector<1x64xf32>
    %14 = tpu.concatenate %12, %13 in 0 : vector<1x64xf32>, vector<1x64xf32> -> vector<2x64xf32>
    %15 = vector.extract_strided_slice %5 {offsets = [3, 0], sizes = [1, 64], strides = [1, 1]} : vector<16x64xf32> to vector<1x64xf32>
    %16 = vector.extract_strided_slice %5 {offsets = [11, 0], sizes = [1, 64], strides = [1, 1]} : vector<16x64xf32> to vector<1x64xf32>
    %17 = tpu.concatenate %15, %16 in 0 : vector<1x64xf32>, vector<1x64xf32> -> vector<2x64xf32>
    %18 = vector.extract_strided_slice %5 {offsets = [4, 0], sizes = [1, 64], strides = [1, 1]} : vector<16x64xf32> to vector<1x64xf32>
    %19 = vector.extract_strided_slice %5 {offsets = [12, 0], sizes = [1, 64], strides = [1, 1]} : vector<16x64xf32> to vector<1x64xf32>
    %20 = tpu.concatenate %18, %19 in 0 : vector<1x64xf32>, vector<1x64xf32> -> vector<2x64xf32>
    %21 = vector.extract_strided_slice %5 {offsets = [5, 0], sizes = [1, 64], strides = [1, 1]} : vector<16x64xf32> to vector<1x64xf32>
    %22 = vector.extract_strided_slice %5 {offsets = [13, 0], sizes = [1, 64], strides = [1, 1]} : vector<16x64xf32> to vector<1x64xf32>
    %23 = tpu.concatenate %21, %22 in 0 : vector<1x64xf32>, vector<1x64xf32> -> vector<2x64xf32>
    %24 = vector.extract_strided_slice %5 {offsets = [6, 0], sizes = [1, 64], strides = [1, 1]} : vector<16x64xf32> to vector<1x64xf32>
    %25 = vector.extract_strided_slice %5 {offsets = [14, 0], sizes = [1, 64], strides = [1, 1]} : vector<16x64xf32> to vector<1x64xf32>
    %26 = tpu.concatenate %24, %25 in 0 : vector<1x64xf32>, vector<1x64xf32> -> vector<2x64xf32>
    %27 = vector.extract_strided_slice %5 {offsets = [7, 0], sizes = [1, 64], strides = [1, 1]} : vector<16x64xf32> to vector<1x64xf32>
    %28 = vector.extract_strided_slice %5 {offsets = [15, 0], sizes = [1, 64], strides = [1, 1]} : vector<16x64xf32> to vector<1x64xf32>
    %29 = tpu.concatenate %27, %28 in 0 : vector<1x64xf32>, vector<1x64xf32> -> vector<2x64xf32>
    %c0_5 = arith.constant 0 : index
    %c0_6 = arith.constant 0 : index
    %30 = vector.load %arg3[%c0_5, %c0_6] : memref<16x64xf32, #tpu.memory_space<vmem>>, vector<16x64xf32>
    %c0_7 = arith.constant 0 : index
    %c0_8 = arith.constant 0 : index
    %31 = vector.load %arg5[%c0_7, %c0_8] : memref<16x64xf32, #tpu.memory_space<vmem>>, vector<16x64xf32>
    %c0_9 = arith.constant 0 : index
    %c0_10 = arith.constant 0 : index
    %32 = vector.load %arg6[%c0_9, %c0_10] : memref<16x64xf32, #tpu.memory_space<vmem>>, vector<16x64xf32>
    %c0_11 = arith.constant 0 : index
    %c0_12 = arith.constant 0 : index
    %33 = vector.load %arg7[%c0_11, %c0_12] : memref<1x64xf32, #tpu.memory_space<vmem>>, vector<1x64xf32>
    %34 = vector.shape_cast %33 : vector<1x64xf32> to vector<1x64xf32>
    %35 = vector.broadcast %34 : vector<1x64xf32> to vector<2x64xf32>
    %36 = tpu.iota {dimensions = array<i32: 1>} : vector<2x64xi32>
    %c32_i32 = arith.constant 32 : i32
    %37 = vector.broadcast %c32_i32 : i32 to vector<2x64xi32>
    %38 = arith.cmpi sge, %36, %37 : vector<2x64xi32>
    %c48_i32 = arith.constant 48 : i32
    %39 = vector.broadcast %c48_i32 : i32 to vector<2x64xi32>
    %40 = arith.cmpi slt, %36, %39 : vector<2x64xi32>
    %41 = arith.andi %38, %40 : vector<2x64xi1>
    %cst_13 = arith.constant 1.000000e+00 : f32
    %cst_14 = arith.constant 5.000000e-01 : f32
    %42 = vector.broadcast %cst_13 : f32 to vector<2x64xf32>
    %43 = vector.broadcast %cst_14 : f32 to vector<2x64xf32>
    %44 = arith.select %41, %42, %43 : vector<2x64xi1>, vector<2x64xf32>
    %cst_15 = arith.constant 0.000000e+00 : f32
    %cst_16 = arith.constant 5.000000e-01 : f32
    %45 = vector.broadcast %cst_15 : f32 to vector<2x64xf32>
    %46 = vector.broadcast %cst_16 : f32 to vector<2x64xf32>
    %47 = arith.select %41, %45, %46 : vector<2x64xi1>, vector<2x64xf32>
    %c0_17 = arith.constant 0 : index
    %c0_18 = arith.constant 0 : index
    %c0_19 = arith.constant 0 : index
    %48 = vector.load %arg8[%c0_17, %c0_18, %c0_19] : memref<2x2x16xf32, #tpu.memory_space<vmem>>, vector<1x2x16xf32>
    %49 = vector.shape_cast %48 : vector<1x2x16xf32> to vector<2x16xf32>
    %c0_20 = arith.constant 0 : index
    %c0_21 = arith.constant 0 : index
    %c0_22 = arith.constant 0 : index
    %50 = vector.load %arg9[%c0_20, %c0_21, %c0_22] : memref<2x2x16xf32, #tpu.memory_space<vmem>>, vector<1x2x16xf32>
    %51 = vector.shape_cast %50 : vector<1x2x16xf32> to vector<2x16xf32>
    %c1 = arith.constant 1 : index
    %c0_23 = arith.constant 0 : index
    %c0_24 = arith.constant 0 : index
    %52 = vector.load %arg8[%c1, %c0_23, %c0_24] : memref<2x2x16xf32, #tpu.memory_space<vmem>>, vector<1x2x16xf32>
    %53 = vector.shape_cast %52 : vector<1x2x16xf32> to vector<2x16xf32>
    %c1_25 = arith.constant 1 : index
    %c0_26 = arith.constant 0 : index
    %c0_27 = arith.constant 0 : index
    %54 = vector.load %arg9[%c1_25, %c0_26, %c0_27] : memref<2x2x16xf32, #tpu.memory_space<vmem>>, vector<1x2x16xf32>
    %55 = vector.shape_cast %54 : vector<1x2x16xf32> to vector<2x16xf32>
    %cst_28 = arith.constant dense<0.000000e+00> : vector<2x64xf32>
    %56 = tpu.matmul %53, %32, %cst_28 {dimension_numbers = #tpu.dot_dimension_numbers<[1], [0], [0], [1], [0, 0, 1, 1], [], []>} : vector<2x16xf32>, vector<16x64xf32>, vector<2x64xf32> -> vector<2x64xf32>
    %57 = arith.addf %56, %35 : vector<2x64xf32>
    %cst_29 = arith.constant dense<0.000000e+00> : vector<2x64xf32>
    %58 = tpu.matmul %49, %30, %cst_29 {dimension_numbers = #tpu.dot_dimension_numbers<[1], [0], [0], [1], [0, 0, 1, 1], [], []>} : vector<2x16xf32>, vector<16x64xf32>, vector<2x64xf32> -> vector<2x64xf32>
    %59 = arith.addf %8, %58 : vector<2x64xf32>
    %60 = math.tanh %59 : vector<2x64xf32>
    %61 = arith.mulf %60, %44 : vector<2x64xf32>
    %62 = arith.addf %61, %47 : vector<2x64xf32>
    %63 = vector.extract_strided_slice %62 {offsets = [0, 0], sizes = [2, 16], strides = [1, 1]} : vector<2x64xf32> to vector<2x16xf32>
    %64 = vector.extract_strided_slice %62 {offsets = [0, 16], sizes = [2, 16], strides = [1, 1]} : vector<2x64xf32> to vector<2x16xf32>
    %65 = vector.extract_strided_slice %62 {offsets = [0, 32], sizes = [2, 16], strides = [1, 1]} : vector<2x64xf32> to vector<2x16xf32>
    %66 = vector.extract_strided_slice %62 {offsets = [0, 48], sizes = [2, 16], strides = [1, 1]} : vector<2x64xf32> to vector<2x16xf32>
    %67 = arith.mulf %64, %51 : vector<2x16xf32>
    %68 = arith.mulf %63, %65 : vector<2x16xf32>
    %69 = arith.addf %67, %68 : vector<2x16xf32>
    %70 = math.tanh %69 : vector<2x16xf32>
    %71 = arith.mulf %66, %70 : vector<2x16xf32>
    %cst_30 = arith.constant dense<0.000000e+00> : vector<2x64xf32>
    %72 = tpu.matmul %71, %31, %cst_30 {dimension_numbers = #tpu.dot_dimension_numbers<[1], [0], [0], [1], [0, 0, 1, 1], [], []>} : vector<2x16xf32>, vector<16x64xf32>, vector<2x64xf32> -> vector<2x64xf32>
    %73 = arith.addf %72, %57 : vector<2x64xf32>
    %74 = math.tanh %73 : vector<2x64xf32>
    %75 = arith.mulf %74, %44 : vector<2x64xf32>
    %76 = arith.addf %75, %47 : vector<2x64xf32>
    %77 = vector.extract_strided_slice %76 {offsets = [0, 0], sizes = [2, 16], strides = [1, 1]} : vector<2x64xf32> to vector<2x16xf32>
    %78 = vector.extract_strided_slice %76 {offsets = [0, 16], sizes = [2, 16], strides = [1, 1]} : vector<2x64xf32> to vector<2x16xf32>
    %79 = vector.extract_strided_slice %76 {offsets = [0, 32], sizes = [2, 16], strides = [1, 1]} : vector<2x64xf32> to vector<2x16xf32>
    %80 = vector.extract_strided_slice %76 {offsets = [0, 48], sizes = [2, 16], strides = [1, 1]} : vector<2x64xf32> to vector<2x16xf32>
    %81 = arith.mulf %78, %55 : vector<2x16xf32>
    %82 = arith.mulf %77, %79 : vector<2x16xf32>
    %83 = arith.addf %81, %82 : vector<2x16xf32>
    %84 = math.tanh %83 : vector<2x16xf32>
    %85 = arith.mulf %80, %84 : vector<2x16xf32>
    %cst_31 = arith.constant dense<0.000000e+00> : vector<2x64xf32>
    %86 = tpu.matmul %85, %32, %cst_31 {dimension_numbers = #tpu.dot_dimension_numbers<[1], [0], [0], [1], [0, 0, 1, 1], [], []>} : vector<2x16xf32>, vector<16x64xf32>, vector<2x64xf32> -> vector<2x64xf32>
    %87 = arith.addf %86, %35 : vector<2x64xf32>
    %cst_32 = arith.constant dense<0.000000e+00> : vector<2x64xf32>
    %88 = tpu.matmul %71, %30, %cst_32 {dimension_numbers = #tpu.dot_dimension_numbers<[1], [0], [0], [1], [0, 0, 1, 1], [], []>} : vector<2x16xf32>, vector<16x64xf32>, vector<2x64xf32> -> vector<2x64xf32>
    %89 = arith.addf %11, %88 : vector<2x64xf32>
    %90 = math.tanh %89 : vector<2x64xf32>
    %91 = arith.mulf %90, %44 : vector<2x64xf32>
    %92 = arith.addf %91, %47 : vector<2x64xf32>
    %93 = vector.extract_strided_slice %92 {offsets = [0, 0], sizes = [2, 16], strides = [1, 1]} : vector<2x64xf32> to vector<2x16xf32>
    %94 = vector.extract_strided_slice %92 {offsets = [0, 16], sizes = [2, 16], strides = [1, 1]} : vector<2x64xf32> to vector<2x16xf32>
    %95 = vector.extract_strided_slice %92 {offsets = [0, 32], sizes = [2, 16], strides = [1, 1]} : vector<2x64xf32> to vector<2x16xf32>
    %96 = vector.extract_strided_slice %92 {offsets = [0, 48], sizes = [2, 16], strides = [1, 1]} : vector<2x64xf32> to vector<2x16xf32>
    %97 = arith.mulf %94, %69 : vector<2x16xf32>
    %98 = arith.mulf %93, %95 : vector<2x16xf32>
    %99 = arith.addf %97, %98 : vector<2x16xf32>
    %100 = math.tanh %99 : vector<2x16xf32>
    %101 = arith.mulf %96, %100 : vector<2x16xf32>
    %cst_33 = arith.constant dense<0.000000e+00> : vector<2x64xf32>
    %102 = tpu.matmul %101, %31, %cst_33 {dimension_numbers = #tpu.dot_dimension_numbers<[1], [0], [0], [1], [0, 0, 1, 1], [], []>} : vector<2x16xf32>, vector<16x64xf32>, vector<2x64xf32> -> vector<2x64xf32>
    %103 = arith.addf %102, %87 : vector<2x64xf32>
    %104 = math.tanh %103 : vector<2x64xf32>
    %105 = arith.mulf %104, %44 : vector<2x64xf32>
    %106 = arith.addf %105, %47 : vector<2x64xf32>
    %107 = vector.extract_strided_slice %106 {offsets = [0, 0], sizes = [2, 16], strides = [1, 1]} : vector<2x64xf32> to vector<2x16xf32>
    %108 = vector.extract_strided_slice %106 {offsets = [0, 16], sizes = [2, 16], strides = [1, 1]} : vector<2x64xf32> to vector<2x16xf32>
    %109 = vector.extract_strided_slice %106 {offsets = [0, 32], sizes = [2, 16], strides = [1, 1]} : vector<2x64xf32> to vector<2x16xf32>
    %110 = vector.extract_strided_slice %106 {offsets = [0, 48], sizes = [2, 16], strides = [1, 1]} : vector<2x64xf32> to vector<2x16xf32>
    %111 = arith.mulf %108, %83 : vector<2x16xf32>
    %112 = arith.mulf %107, %109 : vector<2x16xf32>
    %113 = arith.addf %111, %112 : vector<2x16xf32>
    %114 = math.tanh %113 : vector<2x16xf32>
    %115 = arith.mulf %110, %114 : vector<2x16xf32>
    %cst_34 = arith.constant dense<0.000000e+00> : vector<2x64xf32>
    %116 = tpu.matmul %115, %32, %cst_34 {dimension_numbers = #tpu.dot_dimension_numbers<[1], [0], [0], [1], [0, 0, 1, 1], [], []>} : vector<2x16xf32>, vector<16x64xf32>, vector<2x64xf32> -> vector<2x64xf32>
    %117 = arith.addf %116, %35 : vector<2x64xf32>
    %cst_35 = arith.constant dense<0.000000e+00> : vector<2x64xf32>
    %118 = tpu.matmul %101, %30, %cst_35 {dimension_numbers = #tpu.dot_dimension_numbers<[1], [0], [0], [1], [0, 0, 1, 1], [], []>} : vector<2x16xf32>, vector<16x64xf32>, vector<2x64xf32> -> vector<2x64xf32>
    %119 = arith.addf %14, %118 : vector<2x64xf32>
    %120 = math.tanh %119 : vector<2x64xf32>
    %121 = arith.mulf %120, %44 : vector<2x64xf32>
    %122 = arith.addf %121, %47 : vector<2x64xf32>
    %123 = vector.extract_strided_slice %122 {offsets = [0, 0], sizes = [2, 16], strides = [1, 1]} : vector<2x64xf32> to vector<2x16xf32>
    %124 = vector.extract_strided_slice %122 {offsets = [0, 16], sizes = [2, 16], strides = [1, 1]} : vector<2x64xf32> to vector<2x16xf32>
    %125 = vector.extract_strided_slice %122 {offsets = [0, 32], sizes = [2, 16], strides = [1, 1]} : vector<2x64xf32> to vector<2x16xf32>
    %126 = vector.extract_strided_slice %122 {offsets = [0, 48], sizes = [2, 16], strides = [1, 1]} : vector<2x64xf32> to vector<2x16xf32>
    %127 = arith.mulf %124, %99 : vector<2x16xf32>
    %128 = arith.mulf %123, %125 : vector<2x16xf32>
    %129 = arith.addf %127, %128 : vector<2x16xf32>
    %130 = math.tanh %129 : vector<2x16xf32>
    %131 = arith.mulf %126, %130 : vector<2x16xf32>
    %cst_36 = arith.constant dense<0.000000e+00> : vector<2x64xf32>
    %132 = tpu.matmul %131, %31, %cst_36 {dimension_numbers = #tpu.dot_dimension_numbers<[1], [0], [0], [1], [0, 0, 1, 1], [], []>} : vector<2x16xf32>, vector<16x64xf32>, vector<2x64xf32> -> vector<2x64xf32>
    %133 = arith.addf %132, %117 : vector<2x64xf32>
    %134 = math.tanh %133 : vector<2x64xf32>
    %135 = arith.mulf %134, %44 : vector<2x64xf32>
    %136 = arith.addf %135, %47 : vector<2x64xf32>
    %137 = vector.extract_strided_slice %136 {offsets = [0, 0], sizes = [2, 16], strides = [1, 1]} : vector<2x64xf32> to vector<2x16xf32>
    %138 = vector.extract_strided_slice %136 {offsets = [0, 16], sizes = [2, 16], strides = [1, 1]} : vector<2x64xf32> to vector<2x16xf32>
    %139 = vector.extract_strided_slice %136 {offsets = [0, 32], sizes = [2, 16], strides = [1, 1]} : vector<2x64xf32> to vector<2x16xf32>
    %140 = vector.extract_strided_slice %136 {offsets = [0, 48], sizes = [2, 16], strides = [1, 1]} : vector<2x64xf32> to vector<2x16xf32>
    %141 = arith.mulf %138, %113 : vector<2x16xf32>
    %142 = arith.mulf %137, %139 : vector<2x16xf32>
    %143 = arith.addf %141, %142 : vector<2x16xf32>
    %144 = math.tanh %143 : vector<2x16xf32>
    %145 = arith.mulf %140, %144 : vector<2x16xf32>
    %cst_37 = arith.constant dense<0.000000e+00> : vector<2x64xf32>
    %146 = tpu.matmul %145, %32, %cst_37 {dimension_numbers = #tpu.dot_dimension_numbers<[1], [0], [0], [1], [0, 0, 1, 1], [], []>} : vector<2x16xf32>, vector<16x64xf32>, vector<2x64xf32> -> vector<2x64xf32>
    %147 = arith.addf %146, %35 : vector<2x64xf32>
    %cst_38 = arith.constant dense<0.000000e+00> : vector<2x64xf32>
    %148 = tpu.matmul %131, %30, %cst_38 {dimension_numbers = #tpu.dot_dimension_numbers<[1], [0], [0], [1], [0, 0, 1, 1], [], []>} : vector<2x16xf32>, vector<16x64xf32>, vector<2x64xf32> -> vector<2x64xf32>
    %149 = arith.addf %17, %148 : vector<2x64xf32>
    %150 = math.tanh %149 : vector<2x64xf32>
    %151 = arith.mulf %150, %44 : vector<2x64xf32>
    %152 = arith.addf %151, %47 : vector<2x64xf32>
    %153 = vector.extract_strided_slice %152 {offsets = [0, 0], sizes = [2, 16], strides = [1, 1]} : vector<2x64xf32> to vector<2x16xf32>
    %154 = vector.extract_strided_slice %152 {offsets = [0, 16], sizes = [2, 16], strides = [1, 1]} : vector<2x64xf32> to vector<2x16xf32>
    %155 = vector.extract_strided_slice %152 {offsets = [0, 32], sizes = [2, 16], strides = [1, 1]} : vector<2x64xf32> to vector<2x16xf32>
    %156 = vector.extract_strided_slice %152 {offsets = [0, 48], sizes = [2, 16], strides = [1, 1]} : vector<2x64xf32> to vector<2x16xf32>
    %157 = arith.mulf %154, %129 : vector<2x16xf32>
    %158 = arith.mulf %153, %155 : vector<2x16xf32>
    %159 = arith.addf %157, %158 : vector<2x16xf32>
    %160 = math.tanh %159 : vector<2x16xf32>
    %161 = arith.mulf %156, %160 : vector<2x16xf32>
    %cst_39 = arith.constant dense<0.000000e+00> : vector<2x64xf32>
    %162 = tpu.matmul %161, %31, %cst_39 {dimension_numbers = #tpu.dot_dimension_numbers<[1], [0], [0], [1], [0, 0, 1, 1], [], []>} : vector<2x16xf32>, vector<16x64xf32>, vector<2x64xf32> -> vector<2x64xf32>
    %163 = arith.addf %162, %147 : vector<2x64xf32>
    %164 = math.tanh %163 : vector<2x64xf32>
    %165 = arith.mulf %164, %44 : vector<2x64xf32>
    %166 = arith.addf %165, %47 : vector<2x64xf32>
    %167 = vector.extract_strided_slice %166 {offsets = [0, 0], sizes = [2, 16], strides = [1, 1]} : vector<2x64xf32> to vector<2x16xf32>
    %168 = vector.extract_strided_slice %166 {offsets = [0, 16], sizes = [2, 16], strides = [1, 1]} : vector<2x64xf32> to vector<2x16xf32>
    %169 = vector.extract_strided_slice %166 {offsets = [0, 32], sizes = [2, 16], strides = [1, 1]} : vector<2x64xf32> to vector<2x16xf32>
    %170 = vector.extract_strided_slice %166 {offsets = [0, 48], sizes = [2, 16], strides = [1, 1]} : vector<2x64xf32> to vector<2x16xf32>
    %171 = arith.mulf %168, %143 : vector<2x16xf32>
    %172 = arith.mulf %167, %169 : vector<2x16xf32>
    %173 = arith.addf %171, %172 : vector<2x16xf32>
    %174 = math.tanh %173 : vector<2x16xf32>
    %175 = arith.mulf %170, %174 : vector<2x16xf32>
    %cst_40 = arith.constant dense<0.000000e+00> : vector<2x64xf32>
    %176 = tpu.matmul %175, %32, %cst_40 {dimension_numbers = #tpu.dot_dimension_numbers<[1], [0], [0], [1], [0, 0, 1, 1], [], []>} : vector<2x16xf32>, vector<16x64xf32>, vector<2x64xf32> -> vector<2x64xf32>
    %177 = arith.addf %176, %35 : vector<2x64xf32>
    %cst_41 = arith.constant dense<0.000000e+00> : vector<2x64xf32>
    %178 = tpu.matmul %161, %30, %cst_41 {dimension_numbers = #tpu.dot_dimension_numbers<[1], [0], [0], [1], [0, 0, 1, 1], [], []>} : vector<2x16xf32>, vector<16x64xf32>, vector<2x64xf32> -> vector<2x64xf32>
    %179 = arith.addf %20, %178 : vector<2x64xf32>
    %180 = math.tanh %179 : vector<2x64xf32>
    %181 = arith.mulf %180, %44 : vector<2x64xf32>
    %182 = arith.addf %181, %47 : vector<2x64xf32>
    %183 = vector.extract_strided_slice %182 {offsets = [0, 0], sizes = [2, 16], strides = [1, 1]} : vector<2x64xf32> to vector<2x16xf32>
    %184 = vector.extract_strided_slice %182 {offsets = [0, 16], sizes = [2, 16], strides = [1, 1]} : vector<2x64xf32> to vector<2x16xf32>
    %185 = vector.extract_strided_slice %182 {offsets = [0, 32], sizes = [2, 16], strides = [1, 1]} : vector<2x64xf32> to vector<2x16xf32>
    %186 = vector.extract_strided_slice %182 {offsets = [0, 48], sizes = [2, 16], strides = [1, 1]} : vector<2x64xf32> to vector<2x16xf32>
    %187 = arith.mulf %184, %159 : vector<2x16xf32>
    %188 = arith.mulf %183, %185 : vector<2x16xf32>
    %189 = arith.addf %187, %188 : vector<2x16xf32>
    %190 = math.tanh %189 : vector<2x16xf32>
    %191 = arith.mulf %186, %190 : vector<2x16xf32>
    %cst_42 = arith.constant dense<0.000000e+00> : vector<2x64xf32>
    %192 = tpu.matmul %191, %31, %cst_42 {dimension_numbers = #tpu.dot_dimension_numbers<[1], [0], [0], [1], [0, 0, 1, 1], [], []>} : vector<2x16xf32>, vector<16x64xf32>, vector<2x64xf32> -> vector<2x64xf32>
    %193 = arith.addf %192, %177 : vector<2x64xf32>
    %194 = math.tanh %193 : vector<2x64xf32>
    %195 = arith.mulf %194, %44 : vector<2x64xf32>
    %196 = arith.addf %195, %47 : vector<2x64xf32>
    %197 = vector.extract_strided_slice %196 {offsets = [0, 0], sizes = [2, 16], strides = [1, 1]} : vector<2x64xf32> to vector<2x16xf32>
    %198 = vector.extract_strided_slice %196 {offsets = [0, 16], sizes = [2, 16], strides = [1, 1]} : vector<2x64xf32> to vector<2x16xf32>
    %199 = vector.extract_strided_slice %196 {offsets = [0, 32], sizes = [2, 16], strides = [1, 1]} : vector<2x64xf32> to vector<2x16xf32>
    %200 = vector.extract_strided_slice %196 {offsets = [0, 48], sizes = [2, 16], strides = [1, 1]} : vector<2x64xf32> to vector<2x16xf32>
    %201 = arith.mulf %198, %173 : vector<2x16xf32>
    %202 = arith.mulf %197, %199 : vector<2x16xf32>
    %203 = arith.addf %201, %202 : vector<2x16xf32>
    %204 = math.tanh %203 : vector<2x16xf32>
    %205 = arith.mulf %200, %204 : vector<2x16xf32>
    %cst_43 = arith.constant dense<0.000000e+00> : vector<2x64xf32>
    %206 = tpu.matmul %205, %32, %cst_43 {dimension_numbers = #tpu.dot_dimension_numbers<[1], [0], [0], [1], [0, 0, 1, 1], [], []>} : vector<2x16xf32>, vector<16x64xf32>, vector<2x64xf32> -> vector<2x64xf32>
    %207 = arith.addf %206, %35 : vector<2x64xf32>
    %cst_44 = arith.constant dense<0.000000e+00> : vector<2x64xf32>
    %208 = tpu.matmul %191, %30, %cst_44 {dimension_numbers = #tpu.dot_dimension_numbers<[1], [0], [0], [1], [0, 0, 1, 1], [], []>} : vector<2x16xf32>, vector<16x64xf32>, vector<2x64xf32> -> vector<2x64xf32>
    %209 = arith.addf %23, %208 : vector<2x64xf32>
    %210 = math.tanh %209 : vector<2x64xf32>
    %211 = arith.mulf %210, %44 : vector<2x64xf32>
    %212 = arith.addf %211, %47 : vector<2x64xf32>
    %213 = vector.extract_strided_slice %212 {offsets = [0, 0], sizes = [2, 16], strides = [1, 1]} : vector<2x64xf32> to vector<2x16xf32>
    %214 = vector.extract_strided_slice %212 {offsets = [0, 16], sizes = [2, 16], strides = [1, 1]} : vector<2x64xf32> to vector<2x16xf32>
    %215 = vector.extract_strided_slice %212 {offsets = [0, 32], sizes = [2, 16], strides = [1, 1]} : vector<2x64xf32> to vector<2x16xf32>
    %216 = vector.extract_strided_slice %212 {offsets = [0, 48], sizes = [2, 16], strides = [1, 1]} : vector<2x64xf32> to vector<2x16xf32>
    %217 = arith.mulf %214, %189 : vector<2x16xf32>
    %218 = arith.mulf %213, %215 : vector<2x16xf32>
    %219 = arith.addf %217, %218 : vector<2x16xf32>
    %220 = math.tanh %219 : vector<2x16xf32>
    %221 = arith.mulf %216, %220 : vector<2x16xf32>
    %cst_45 = arith.constant dense<0.000000e+00> : vector<2x64xf32>
    %222 = tpu.matmul %221, %31, %cst_45 {dimension_numbers = #tpu.dot_dimension_numbers<[1], [0], [0], [1], [0, 0, 1, 1], [], []>} : vector<2x16xf32>, vector<16x64xf32>, vector<2x64xf32> -> vector<2x64xf32>
    %223 = arith.addf %222, %207 : vector<2x64xf32>
    %224 = math.tanh %223 : vector<2x64xf32>
    %225 = arith.mulf %224, %44 : vector<2x64xf32>
    %226 = arith.addf %225, %47 : vector<2x64xf32>
    %227 = vector.extract_strided_slice %226 {offsets = [0, 0], sizes = [2, 16], strides = [1, 1]} : vector<2x64xf32> to vector<2x16xf32>
    %228 = vector.extract_strided_slice %226 {offsets = [0, 16], sizes = [2, 16], strides = [1, 1]} : vector<2x64xf32> to vector<2x16xf32>
    %229 = vector.extract_strided_slice %226 {offsets = [0, 32], sizes = [2, 16], strides = [1, 1]} : vector<2x64xf32> to vector<2x16xf32>
    %230 = vector.extract_strided_slice %226 {offsets = [0, 48], sizes = [2, 16], strides = [1, 1]} : vector<2x64xf32> to vector<2x16xf32>
    %231 = arith.mulf %228, %203 : vector<2x16xf32>
    %232 = arith.mulf %227, %229 : vector<2x16xf32>
    %233 = arith.addf %231, %232 : vector<2x16xf32>
    %234 = math.tanh %233 : vector<2x16xf32>
    %235 = arith.mulf %230, %234 : vector<2x16xf32>
    %cst_46 = arith.constant dense<0.000000e+00> : vector<2x64xf32>
    %236 = tpu.matmul %235, %32, %cst_46 {dimension_numbers = #tpu.dot_dimension_numbers<[1], [0], [0], [1], [0, 0, 1, 1], [], []>} : vector<2x16xf32>, vector<16x64xf32>, vector<2x64xf32> -> vector<2x64xf32>
    %237 = arith.addf %236, %35 : vector<2x64xf32>
    %cst_47 = arith.constant dense<0.000000e+00> : vector<2x64xf32>
    %238 = tpu.matmul %221, %30, %cst_47 {dimension_numbers = #tpu.dot_dimension_numbers<[1], [0], [0], [1], [0, 0, 1, 1], [], []>} : vector<2x16xf32>, vector<16x64xf32>, vector<2x64xf32> -> vector<2x64xf32>
    %239 = arith.addf %26, %238 : vector<2x64xf32>
    %240 = math.tanh %239 : vector<2x64xf32>
    %241 = arith.mulf %240, %44 : vector<2x64xf32>
    %242 = arith.addf %241, %47 : vector<2x64xf32>
    %243 = vector.extract_strided_slice %242 {offsets = [0, 0], sizes = [2, 16], strides = [1, 1]} : vector<2x64xf32> to vector<2x16xf32>
    %244 = vector.extract_strided_slice %242 {offsets = [0, 16], sizes = [2, 16], strides = [1, 1]} : vector<2x64xf32> to vector<2x16xf32>
    %245 = vector.extract_strided_slice %242 {offsets = [0, 32], sizes = [2, 16], strides = [1, 1]} : vector<2x64xf32> to vector<2x16xf32>
    %246 = vector.extract_strided_slice %242 {offsets = [0, 48], sizes = [2, 16], strides = [1, 1]} : vector<2x64xf32> to vector<2x16xf32>
    %247 = arith.mulf %244, %219 : vector<2x16xf32>
    %248 = arith.mulf %243, %245 : vector<2x16xf32>
    %249 = arith.addf %247, %248 : vector<2x16xf32>
    %250 = math.tanh %249 : vector<2x16xf32>
    %251 = arith.mulf %246, %250 : vector<2x16xf32>
    %cst_48 = arith.constant dense<0.000000e+00> : vector<2x64xf32>
    %252 = tpu.matmul %251, %31, %cst_48 {dimension_numbers = #tpu.dot_dimension_numbers<[1], [0], [0], [1], [0, 0, 1, 1], [], []>} : vector<2x16xf32>, vector<16x64xf32>, vector<2x64xf32> -> vector<2x64xf32>
    %253 = arith.addf %252, %237 : vector<2x64xf32>
    %254 = math.tanh %253 : vector<2x64xf32>
    %255 = arith.mulf %254, %44 : vector<2x64xf32>
    %256 = arith.addf %255, %47 : vector<2x64xf32>
    %257 = vector.extract_strided_slice %256 {offsets = [0, 0], sizes = [2, 16], strides = [1, 1]} : vector<2x64xf32> to vector<2x16xf32>
    %258 = vector.extract_strided_slice %256 {offsets = [0, 16], sizes = [2, 16], strides = [1, 1]} : vector<2x64xf32> to vector<2x16xf32>
    %259 = vector.extract_strided_slice %256 {offsets = [0, 32], sizes = [2, 16], strides = [1, 1]} : vector<2x64xf32> to vector<2x16xf32>
    %260 = vector.extract_strided_slice %256 {offsets = [0, 48], sizes = [2, 16], strides = [1, 1]} : vector<2x64xf32> to vector<2x16xf32>
    %261 = arith.mulf %258, %233 : vector<2x16xf32>
    %262 = arith.mulf %257, %259 : vector<2x16xf32>
    %263 = arith.addf %261, %262 : vector<2x16xf32>
    %264 = math.tanh %263 : vector<2x16xf32>
    %265 = arith.mulf %260, %264 : vector<2x16xf32>
    %cst_49 = arith.constant dense<0.000000e+00> : vector<2x64xf32>
    %266 = tpu.matmul %265, %32, %cst_49 {dimension_numbers = #tpu.dot_dimension_numbers<[1], [0], [0], [1], [0, 0, 1, 1], [], []>} : vector<2x16xf32>, vector<16x64xf32>, vector<2x64xf32> -> vector<2x64xf32>
    %267 = arith.addf %266, %35 : vector<2x64xf32>
    %cst_50 = arith.constant dense<0.000000e+00> : vector<2x64xf32>
    %268 = tpu.matmul %251, %30, %cst_50 {dimension_numbers = #tpu.dot_dimension_numbers<[1], [0], [0], [1], [0, 0, 1, 1], [], []>} : vector<2x16xf32>, vector<16x64xf32>, vector<2x64xf32> -> vector<2x64xf32>
    %269 = arith.addf %29, %268 : vector<2x64xf32>
    %270 = math.tanh %269 : vector<2x64xf32>
    %271 = arith.mulf %270, %44 : vector<2x64xf32>
    %272 = arith.addf %271, %47 : vector<2x64xf32>
    %273 = vector.extract_strided_slice %272 {offsets = [0, 0], sizes = [2, 16], strides = [1, 1]} : vector<2x64xf32> to vector<2x16xf32>
    %274 = vector.extract_strided_slice %272 {offsets = [0, 16], sizes = [2, 16], strides = [1, 1]} : vector<2x64xf32> to vector<2x16xf32>
    %275 = vector.extract_strided_slice %272 {offsets = [0, 32], sizes = [2, 16], strides = [1, 1]} : vector<2x64xf32> to vector<2x16xf32>
    %276 = vector.extract_strided_slice %272 {offsets = [0, 48], sizes = [2, 16], strides = [1, 1]} : vector<2x64xf32> to vector<2x16xf32>
    %277 = arith.mulf %274, %249 : vector<2x16xf32>
    %278 = arith.mulf %273, %275 : vector<2x16xf32>
    %279 = arith.addf %277, %278 : vector<2x16xf32>
    %280 = math.tanh %279 : vector<2x16xf32>
    %281 = arith.mulf %276, %280 : vector<2x16xf32>
    %cst_51 = arith.constant dense<0.000000e+00> : vector<2x64xf32>
    %282 = tpu.matmul %281, %31, %cst_51 {dimension_numbers = #tpu.dot_dimension_numbers<[1], [0], [0], [1], [0, 0, 1, 1], [], []>} : vector<2x16xf32>, vector<16x64xf32>, vector<2x64xf32> -> vector<2x64xf32>
    %283 = arith.addf %282, %267 : vector<2x64xf32>
    %284 = math.tanh %283 : vector<2x64xf32>
    %285 = arith.mulf %284, %44 : vector<2x64xf32>
    %286 = arith.addf %285, %47 : vector<2x64xf32>
    %287 = vector.extract_strided_slice %286 {offsets = [0, 0], sizes = [2, 16], strides = [1, 1]} : vector<2x64xf32> to vector<2x16xf32>
    %288 = vector.extract_strided_slice %286 {offsets = [0, 16], sizes = [2, 16], strides = [1, 1]} : vector<2x64xf32> to vector<2x16xf32>
    %289 = vector.extract_strided_slice %286 {offsets = [0, 32], sizes = [2, 16], strides = [1, 1]} : vector<2x64xf32> to vector<2x16xf32>
    %290 = vector.extract_strided_slice %286 {offsets = [0, 48], sizes = [2, 16], strides = [1, 1]} : vector<2x64xf32> to vector<2x16xf32>
    %291 = arith.mulf %288, %263 : vector<2x16xf32>
    %292 = arith.mulf %287, %289 : vector<2x16xf32>
    %293 = arith.addf %291, %292 : vector<2x16xf32>
    %294 = math.tanh %293 : vector<2x16xf32>
    %295 = arith.mulf %290, %294 : vector<2x16xf32>
    %c0_52 = arith.constant 0 : index
    %c0_53 = arith.constant 0 : index
    %296 = vector.load %arg10[%c0_52, %c0_53] : memref<16x6xf32, #tpu.memory_space<vmem>>, vector<16x6xf32>
    %cst_54 = arith.constant dense<0.000000e+00> : vector<2x6xf32>
    %297 = tpu.matmul %295, %296, %cst_54 {dimension_numbers = #tpu.dot_dimension_numbers<[1], [0], [0], [1], [0, 0, 1, 1], [], []>} : vector<2x16xf32>, vector<16x6xf32>, vector<2x6xf32> -> vector<2x6xf32>
    %c0_55 = arith.constant 0 : index
    %c0_56 = arith.constant 0 : index
    %298 = vector.load %arg11[%c0_55, %c0_56] : memref<1x6xf32, #tpu.memory_space<vmem>>, vector<1x6xf32>
    %299 = vector.broadcast %298 : vector<1x6xf32> to vector<2x6xf32>
    %300 = arith.addf %297, %299 : vector<2x6xf32>
    %c0_57 = arith.constant 0 : index
    %c0_58 = arith.constant 0 : index
    %301 = vector.load %arg12[%c0_57, %c0_58] : memref<2x6xf32, #tpu.memory_space<vmem>>, vector<2x6xf32>
    tpu.vector_store %arg12[%c0_57, %c0_58], %300 {strides = array<i32>} : memref<2x6xf32, #tpu.memory_space<vmem>>, vector<2x6xf32>,
    return
  }
  func.func @transform_0(%arg0: i32) -> (i32, i32) {
    %c0_i32 = arith.constant 0 : i32
    %c0_i32_0 = arith.constant 0 : i32
    %c0_i32_1 = arith.constant 0 : i32
    return %c0_i32, %c0_i32_0 : i32, i32
  }
  func.func @transform_1(%arg0: i32) -> (i32, i32) {
    %c0_i32 = arith.constant 0 : i32
    %c0_i32_0 = arith.constant 0 : i32
    %c0_i32_1 = arith.constant 0 : i32
    return %c0_i32, %c0_i32_0 : i32, i32
  }
  func.func @transform_2(%arg0: i32) -> (i32, i32) {
    %c0_i32 = arith.constant 0 : i32
    %c0_i32_0 = arith.constant 0 : i32
    %c0_i32_1 = arith.constant 0 : i32
    return %c0_i32, %c0_i32_0 : i32, i32
  }
  func.func @transform_3(%arg0: i32) -> (i32, i32) {
    %c0_i32 = arith.constant 0 : i32
    %c0_i32_0 = arith.constant 0 : i32
    %c0_i32_1 = arith.constant 0 : i32
    return %c0_i32, %c0_i32_0 : i32, i32
  }
  func.func @transform_4(%arg0: i32) -> (i32, i32) {
    %c0_i32 = arith.constant 0 : i32
    %c0_i32_0 = arith.constant 0 : i32
    %c0_i32_1 = arith.constant 0 : i32
    return %c0_i32, %c0_i32_0 : i32, i32
  }
  func.func @transform_5(%arg0: i32) -> (i32, i32) {
    %c0_i32 = arith.constant 0 : i32
    %c0_i32_0 = arith.constant 0 : i32
    %c0_i32_1 = arith.constant 0 : i32
    return %c0_i32, %c0_i32_0 : i32, i32
  }
  func.func @transform_6(%arg0: i32) -> (i32, i32) {
    %c0_i32 = arith.constant 0 : i32
    %c0_i32_0 = arith.constant 0 : i32
    %c0_i32_1 = arith.constant 0 : i32
    return %c0_i32, %c0_i32_0 : i32, i32
  }
  func.func @transform_7(%arg0: i32) -> (i32, i32, i32) {
    %c0_i32 = arith.constant 0 : i32
    %c0_i32_0 = arith.constant 0 : i32
    %c0_i32_1 = arith.constant 0 : i32
    %c0_i32_2 = arith.constant 0 : i32
    return %c0_i32, %c0_i32_0, %c0_i32_1 : i32, i32, i32
  }
  func.func @transform_8(%arg0: i32) -> (i32, i32, i32) {
    %c0_i32 = arith.constant 0 : i32
    %c0_i32_0 = arith.constant 0 : i32
    %c0_i32_1 = arith.constant 0 : i32
    %c0_i32_2 = arith.constant 0 : i32
    return %c0_i32, %c0_i32_0, %c0_i32_1 : i32, i32, i32
  }
  func.func @transform_9(%arg0: i32) -> (i32, i32) {
    %c0_i32 = arith.constant 0 : i32
    %c0_i32_0 = arith.constant 0 : i32
    %c0_i32_1 = arith.constant 0 : i32
    return %c0_i32, %c0_i32_0 : i32, i32
  }
  func.func @transform_10(%arg0: i32) -> (i32, i32) {
    %c0_i32 = arith.constant 0 : i32
    %c0_i32_0 = arith.constant 0 : i32
    %c0_i32_1 = arith.constant 0 : i32
    return %c0_i32, %c0_i32_0 : i32, i32
  }
  func.func @transform_11(%arg0: i32) -> (i32, i32) {
    %c0_i32 = arith.constant 0 : i32
    %c0_i32_0 = arith.constant 0 : i32
    %c0_i32_1 = arith.constant 0 : i32
    return %c0_i32, %c0_i32_0 : i32, i32
  }
}

</mosaic_0001>

<llo_original>
// kernel: tpu_custom_call.1
$region0: #{tpu_custom_call.1}
  #allocation0 [shape = 'u32[]', space=smem, size = 0x4, offset = 0x4, fixed_abs, tag = 'smem constant byte address 0x4 - core index']
  #allocation1 [shape = 'u32[72,128]{1,0:T(1,128)}', space=vmem, size = 0x9000, scoped, tag = 'internal scratch']
  %s0 = inlined_call_operand.vmem [shape: f32[16,400], index: 0, kind: input, shape index: {}]
  %s1 = inlined_call_operand.vmem [shape: f32[400,64], index: 1, kind: input, shape index: {}]
  %s2 = inlined_call_operand.vmem [shape: f32[16,64], index: 2, kind: input, shape index: {}]
  %s3 = inlined_call_operand.vmem [shape: f32[1,64], index: 3, kind: input, shape index: {}]
  %s4 = inlined_call_operand.vmem [shape: f32[16,64], index: 4, kind: input, shape index: {}]
  %s5 = inlined_call_operand.vmem [shape: f32[16,64], index: 5, kind: input, shape index: {}]
  %s6 = inlined_call_operand.vmem [shape: f32[1,64], index: 6, kind: input, shape index: {}]
  %s7 = inlined_call_operand.vmem [shape: f32[2,2,16], index: 7, kind: input, shape index: {}]
  %s8 = inlined_call_operand.vmem [shape: f32[2,2,16], index: 8, kind: input, shape index: {}]
  %s9 = inlined_call_operand.vmem [shape: f32[16,6], index: 9, kind: input, shape index: {}]
  %s10 = inlined_call_operand.vmem [shape: f32[1,6], index: 10, kind: input, shape index: {}]
  %s11 = inlined_call_operand.hbm [shape: f32[2,6], index: 11, kind: output, shape index: {}]
  %s12 = sld [smem:[#allocation0]]
  $region54: #{tpu_custom_call.1} parent=0
    _
  %s14 = ssub.s32 1, %s12
  %s15 = scalar_select 0, %s14, %s12
  $region1: #{tpu_custom_call.1} parent=0
    #allocation2 [shape = 'u8[1024]{0}', space=vmem, size = 0x400, scoped, tag = 'output window, operand 0, single buffered']
    #allocation3 [shape = 's32[1]{0}', space=sflag, size = 0x4, scoped, tag = 'scoped memory for tpu_custom_call.1']
    %16 = vsyncpa [#allocation3], 0
    // Predicated region
    $region2: #{tpu_custom_call.1} parent=1 // pred_check
      _
    $region3: #{tpu_custom_call.1} parent=1 // pred_check_branch
      %18 = sbr.rel (0) target = $region5
    $region4: #{tpu_custom_call.1} parent=1 // pred_region
      _
    $region5: #{tpu_custom_call.1} parent=1 // pred_fallthru
      _
    // Predicated region
    $region6: #{tpu_custom_call.1} parent=1 // pred_check
      _
    $region7: #{tpu_custom_call.1} parent=1 // pred_check_branch
      %20 = sbr.rel (0) target = $region9
    $region8: #{tpu_custom_call.1} parent=1 // pred_region
      _
    $region9: #{tpu_custom_call.1} parent=1 // pred_fallthru
      _
    // Predicated region
    $region10: #{tpu_custom_call.1} parent=1 // pred_check
      _
    $region11: #{tpu_custom_call.1} parent=1 // pred_check_branch
      %22 = sbr.rel (0) target = $region13
    $region12: #{tpu_custom_call.1} parent=1 // pred_region
      _
    $region13: #{tpu_custom_call.1} parent=1 // pred_fallthru
      _
    // Predicated region
    $region14: #{tpu_custom_call.1} parent=1 // pred_check
      _
    $region15: #{tpu_custom_call.1} parent=1 // pred_check_branch
      %24 = sbr.rel (0) target = $region17
    $region16: #{tpu_custom_call.1} parent=1 // pred_region
      _
    $region17: #{tpu_custom_call.1} parent=1 // pred_fallthru
      _
    // Predicated region
    $region18: #{tpu_custom_call.1} parent=1 // pred_check
      _
    $region19: #{tpu_custom_call.1} parent=1 // pred_check_branch
      %26 = sbr.rel (0) target = $region21
    $region20: #{tpu_custom_call.1} parent=1 // pred_region
      _
    $region21: #{tpu_custom_call.1} parent=1 // pred_fallthru
      _
    // Predicated region
    $region22: #{tpu_custom_call.1} parent=1 // pred_check
      _
    $region23: #{tpu_custom_call.1} parent=1 // pred_check_branch
      %28 = sbr.rel (0) target = $region25
    $region24: #{tpu_custom_call.1} parent=1 // pred_region
      _
    $region25: #{tpu_custom_call.1} parent=1 // pred_fallthru
      _
    // Predicated region
    $region26: #{tpu_custom_call.1} parent=1 // pred_check
      _
    $region27: #{tpu_custom_call.1} parent=1 // pred_check_branch
      %30 = sbr.rel (0) target = $region29
    $region28: #{tpu_custom_call.1} parent=1 // pred_region
      _
    $region29: #{tpu_custom_call.1} parent=1 // pred_fallthru
      _
    // Predicated region
    $region30: #{tpu_custom_call.1} parent=1 // pred_check
      _
    $region31: #{tpu_custom_call.1} parent=1 // pred_check_branch
      %32 = sbr.rel (0) target = $region33
    $region32: #{tpu_custom_call.1} parent=1 // pred_region
      _
    $region33: #{tpu_custom_call.1} parent=1 // pred_fallthru
      _
    // Predicated region
    $region34: #{tpu_custom_call.1} parent=1 // pred_check
      _
    $region35: #{tpu_custom_call.1} parent=1 // pred_check_branch
      %34 = sbr.rel (0) target = $region37
    $region36: #{tpu_custom_call.1} parent=1 // pred_region
      _
    $region37: #{tpu_custom_call.1} parent=1 // pred_fallthru
      _
    // Predicated region
    $region38: #{tpu_custom_call.1} parent=1 // pred_check
      _
    $region39: #{tpu_custom_call.1} parent=1 // pred_check_branch
      %36 = sbr.rel (0) target = $region41
    $region40: #{tpu_custom_call.1} parent=1 // pred_region
      _
    $region41: #{tpu_custom_call.1} parent=1 // pred_fallthru
      _
    // Predicated region
    $region42: #{tpu_custom_call.1} parent=1 // pred_check
      _
    $region43: #{tpu_custom_call.1} parent=1 // pred_check_branch
      %38 = sbr.rel (0) target = $region45
    $region44: #{tpu_custom_call.1} parent=1 // pred_region
      _
    $region45: #{tpu_custom_call.1} parent=1 // pred_fallthru
      _
    %v39 = vld [vmem:[%s0] sm:$0xff]
    %v40 = vld [vmem:[%s0 + $0x8] sm:$0xff]
    %v41 = vld [vmem:[%s0 + $0x10] sm:$0xff]
    %v42 = vld [vmem:[%s0 + $0x18] sm:$0xff]
    %v43 = vld [vmem:[%s0 + $0x20] sm:$0xff]
    %v44 = vld [vmem:[%s0 + $0x28] sm:$0xff]
    %v45 = vld [vmem:[%s0 + $0x30] sm:$0xff]
    %v46 = vld [vmem:[%s0 + $0x38] sm:$0xff]
    %v47 = vld [vmem:[%s1] sm:$0xff]
    %v48 = vld [vmem:[%s1 + $0x8] sm:$0xff]
    %v49 = vld [vmem:[%s1 + $0x10] sm:$0xff]
    %v50 = vld [vmem:[%s1 + $0x18] sm:$0xff]
    %v51 = vld [vmem:[%s1 + $0x20] sm:$0xff]
    %v52 = vld [vmem:[%s1 + $0x28] sm:$0xff]
    %v53 = vld [vmem:[%s1 + $0x30] sm:$0xff]
    %v54 = vld [vmem:[%s1 + $0x38] sm:$0xff]
    %v55 = vld [vmem:[%s1 + $0x40] sm:$0xff]
    %v56 = vld [vmem:[%s1 + $0x48] sm:$0xff]
    %v57 = vld [vmem:[%s1 + $0x50] sm:$0xff]
    %v58 = vld [vmem:[%s1 + $0x58] sm:$0xff]
    %v59 = vld [vmem:[%s1 + $0x60] sm:$0xff]
    %v60 = vld [vmem:[%s1 + $0x68] sm:$0xff]
    %v61 = vld [vmem:[%s1 + $0x70] sm:$0xff]
    %v62 = vld [vmem:[%s1 + $0x78] sm:$0xff]
    %v63 = vld [vmem:[%s1 + $0x80] sm:$0xff]
    %v64 = vld [vmem:[%s1 + $0x88] sm:$0xff]
    %v65 = vld [vmem:[%s1 + $0x90] sm:$0xff]
    %v66 = vld [vmem:[%s1 + $0x98] sm:$0xff]
    %v67 = vld [vmem:[%s1 + $0xa0] sm:$0xff]
    %v68 = vld [vmem:[%s1 + $0xa8] sm:$0xff]
    %v69 = vld [vmem:[%s1 + $0xb0] sm:$0xff]
    %v70 = vld [vmem:[%s1 + $0xb8] sm:$0xff]
    %v71 = vld [vmem:[%s1 + $0xc0] sm:$0xff]
    %v72 = vld [vmem:[%s1 + $0xc8] sm:$0xff]
    %v73 = vld [vmem:[%s1 + $0xd0] sm:$0xff]
    %v74 = vld [vmem:[%s1 + $0xd8] sm:$0xff]
    %v75 = vld [vmem:[%s1 + $0xe0] sm:$0xff]
    %v76 = vld [vmem:[%s1 + $0xe8] sm:$0xff]
    %v77 = vld [vmem:[%s1 + $0xf0] sm:$0xff]
    %v78 = vld [vmem:[%s1 + $0xf8] sm:$0xff]
    %v79 = vld [vmem:[%s1 + $0x100] sm:$0xff]
    %v80 = vld [vmem:[%s1 + $0x108] sm:$0xff]
    %v81 = vld [vmem:[%s1 + $0x110] sm:$0xff]
    %v82 = vld [vmem:[%s1 + $0x118] sm:$0xff]
    %v83 = vld [vmem:[%s1 + $0x120] sm:$0xff]
    %v84 = vld [vmem:[%s1 + $0x128] sm:$0xff]
    %v85 = vld [vmem:[%s1 + $0x130] sm:$0xff]
    %v86 = vld [vmem:[%s1 + $0x138] sm:$0xff]
    %v87 = vld [vmem:[%s1 + $0x140] sm:$0xff]
    %v88 = vld [vmem:[%s1 + $0x148] sm:$0xff]
    %v89 = vld [vmem:[%s1 + $0x150] sm:$0xff]
    %v90 = vld [vmem:[%s1 + $0x158] sm:$0xff]
    %v91 = vld [vmem:[%s1 + $0x160] sm:$0xff]
    %v92 = vld [vmem:[%s1 + $0x168] sm:$0xff]
    %v93 = vld [vmem:[%s1 + $0x170] sm:$0xff]
    %v94 = vld [vmem:[%s1 + $0x178] sm:$0xff]
    %v95 = vld [vmem:[%s1 + $0x180] sm:$0xff]
    %v96 = vld [vmem:[%s1 + $0x188] sm:$0xff]
    %v97 = vld [vmem:[%s3] sm:$0x1]
    %v99 = vperm.slane %v97, 0
    %vm101 = vcmask 130048
    %v103 = vsel %vm101, %v42, 0
    %v106 = vsel %vm101, %v46, 0
    %108 = vmatpush.msra.mxu0 %v62
    %109 = vmatpush.msra.mxu0 %v61
    %110 = vmatpush.msra.mxu0 %v60
    %111 = vmatpush.msra.mxu0 %v59
    %112 = vmatpush.msra.mxu0 %v58
    %113 = vmatpush.msra.mxu0 %v57
    %114 = vmatpush.msra.mxu0 %v56
    %115 = vmatpush.msra.mxu0 %v55
    %116 = vmatpush.msra.mxu0 %v54
    %117 = vmatpush.msra.mxu0 %v53
    %118 = vmatpush.msra.mxu0 %v52
    %119 = vmatpush.msra.mxu0 %v51
    %120 = vmatpush.msra.mxu0 %v50
    %121 = vmatpush.msra.mxu0 %v49
    %122 = vmatpush.msra.mxu0 %v48
    %123 = vmatpush.msra.mxu0 %v47
    %124 = vmatmul.f32.gmra.mxu0 %v39
    %v125 = vpop.f32.mrf.mxu0
    %v126 = vadd.f32 %v99, %v125
    %127 = vmatmul.f32.gmra.mxu0 %v43
    %v128 = vpop.f32.mrf.mxu0
    %v129 = vadd.f32 %v99, %v128
    %130 = vdwg.mxu0
    %131 = vmatpush.msra.mxu0 %v78
    %132 = vmatpush.msra.mxu0 %v77
    %133 = vmatpush.msra.mxu0 %v76
    %134 = vmatpush.msra.mxu0 %v75
    %135 = vmatpush.msra.mxu0 %v74
    %136 = vmatpush.msra.mxu0 %v73
    %137 = vmatpush.msra.mxu0 %v72
    %138 = vmatpush.msra.mxu0 %v71
    %139 = vmatpush.msra.mxu0 %v70
    %140 = vmatpush.msra.mxu0 %v69
    %141 = vmatpush.msra.mxu0 %v68
    %142 = vmatpush.msra.mxu0 %v67
    %143 = vmatpush.msra.mxu0 %v66
    %144 = vmatpush.msra.mxu0 %v65
    %145 = vmatpush.msra.mxu0 %v64
    %146 = vmatpush.msra.mxu0 %v63
    %147 = vmatmul.f32.gmra.mxu0 %v40
    %v148 = vpop.f32.mrf.mxu0
    %v149 = vadd.f32 %v126, %v148
    %150 = vmatmul.f32.gmra.mxu0 %v44
    %v151 = vpop.f32.mrf.mxu0
    %v152 = vadd.f32 %v129, %v151
    %153 = vdwg.mxu0
    %154 = vmatpush.msra.mxu0 %v94
    %155 = vmatpush.msra.mxu0 %v93
    %156 = vmatpush.msra.mxu0 %v92
    %157 = vmatpush.msra.mxu0 %v91
    %158 = vmatpush.msra.mxu0 %v90
    %159 = vmatpush.msra.mxu0 %v89
    %160 = vmatpush.msra.mxu0 %v88
    %161 = vmatpush.msra.mxu0 %v87
    %162 = vmatpush.msra.mxu0 %v86
    %163 = vmatpush.msra.mxu0 %v85
    %164 = vmatpush.msra.mxu0 %v84
    %165 = vmatpush.msra.mxu0 %v83
    %166 = vmatpush.msra.mxu0 %v82
    %167 = vmatpush.msra.mxu0 %v81
    %168 = vmatpush.msra.mxu0 %v80
    %169 = vmatpush.msra.mxu0 %v79
    %170 = vmatmul.f32.gmra.mxu0 %v41
    %v171 = vpop.f32.mrf.mxu0
    %v172 = vadd.f32 %v149, %v171
    %173 = vmatmul.f32.gmra.mxu0 %v45
    %v174 = vpop.f32.mrf.mxu0
    %v175 = vadd.f32 %v152, %v174
    %176 = vdwg.mxu0
    %177 = vmatpush.msra.mxu0 0.0
    %178 = vmatpush.msra.mxu0 0.0
    %179 = vmatpush.msra.mxu0 0.0
    %180 = vmatpush.msra.mxu0 0.0
    %181 = vmatpush.msra.mxu0 0.0
    %182 = vmatpush.msra.mxu0 0.0
    %183 = vmatpush.msra.mxu0 0.0
    %184 = vmatpush.msra.mxu0 0.0
    %185 = vmatpush.msra.mxu0 0.0
    %186 = vmatpush.msra.mxu0 0.0
    %187 = vmatpush.msra.mxu0 0.0
    %188 = vmatpush.msra.mxu0 0.0
    %189 = vmatpush.msra.mxu0 0.0
    %190 = vmatpush.msra.mxu0 0.0
    %191 = vmatpush.msra.mxu0 %v96
    %192 = vmatpush.msra.mxu0 %v95
    %193 = vmatmul.f32.gmra.mxu0 %v103
    %v194 = vpop.f32.mrf.mxu0
    %v195 = vadd.f32 %v172, %v194
    %196 = vmatmul.f32.gmra.mxu0 %v106
    %v197 = vpop.f32.mrf.mxu0
    %v198 = vadd.f32 %v175, %v197
    %199 = vdwg.mxu0
    %v201 = vrot.slane %v198, 7
    %vm203 = vcmask 1040384
    %v204 = vsel %vm203, %v195, %v201
    %v206 = vrot.slane %v195, 1
    %v208 = vsel %vm203, %v206, %v198
    %v209 = vrot.slane %v195, 2
    %v211 = vrot.slane %v198, 1
    %v213 = vsel %vm203, %v209, %v211
    %v214 = vrot.slane %v195, 3
    %v216 = vrot.slane %v198, 2
    %v218 = vsel %vm203, %v214, %v216
    %v219 = vrot.slane %v195, 4
    %v221 = vrot.slane %v198, 3
    %v223 = vsel %vm203, %v219, %v221
    %v224 = vrot.slane %v195, 5
    %v226 = vrot.slane %v198, 4
    %v228 = vsel %vm203, %v224, %v226
    %v229 = vrot.slane %v195, 6
    %v231 = vrot.slane %v198, 5
    %v233 = vsel %vm203, %v229, %v231
    %v234 = vrot.slane %v195, 7
    %v236 = vrot.slane %v198, 6
    %v238 = vsel %vm203, %v234, %v236
    %v239 = vld [vmem:[%s2] sm:$0xff]
    %v240 = vld [vmem:[%s2 + $0x8] sm:$0xff]
    %v241 = vld [vmem:[%s4] sm:$0xff]
    %v242 = vld [vmem:[%s4 + $0x8] sm:$0xff]
    %v243 = vld [vmem:[%s5] sm:$0xff]
    %v244 = vld [vmem:[%s5 + $0x8] sm:$0xff]
    %v245 = vld [vmem:[%s6] sm:$0x1]
    %v247 = vperm.slane %v245, 0
    %v249 = vlaneseq
    %v250 = vand.u32 %v249, 127
    %vm251 = vcmp.ge.s32.totalorder %v250, 32
    %vm252 = vcmp.lt.s32.totalorder %v250, 48
    %vm253 = vmand %vm251, %vm252
    %v254 = vsel %vm253, 1.0, 0.5
    %v255 = vsel %vm253, 0.0, 0.5
    %v256 = vld [vmem:[%s7] sm:$0x3]
    %v257 = vld [vmem:[%s8] sm:$0x3]
    %s258 = scalar_lea.vmem %s7, 2
    %v259 = vld [vmem:[%s258] sm:$0x3]
    %s260 = scalar_lea.vmem %s8, 2
    %v261 = vld [vmem:[%s260] sm:$0x3]
    %v263 = vsel %vm101, %v259, 0
    %265 = vmatpush.msra.mxu0 0.0
    %266 = vmatpush.msra.mxu0 0.0
    %267 = vmatpush.msra.mxu0 0.0
    %268 = vmatpush.msra.mxu0 0.0
    %269 = vmatpush.msra.mxu0 0.0
    %270 = vmatpush.msra.mxu0 0.0
    %271 = vmatpush.msra.mxu0 0.0
    %272 = vmatpush.msra.mxu0 0.0
    %273 = vmatpush.msra.mxu0 0.0
    %274 = vmatpush.msra.mxu0 0.0
    %275 = vmatpush.msra.mxu0 0.0
    %276 = vmatpush.msra.mxu0 0.0
    %277 = vmatpush.msra.mxu0 0.0
    %278 = vmatpush.msra.mxu0 0.0
    %279 = vmatpush.msra.mxu0 %v244
    %280 = vmatpush.msra.mxu0 %v243
    %281 = vmatmul.f32.gmra.mxu0 %v263
    %v282 = vpop.f32.mrf.mxu0
    %v283 = vadd.f32 %v247, %v282
    %284 = vdwg.mxu0
    %v286 = vsel %vm101, %v256, 0
    %288 = vmatpush.msra.mxu0 0.0
    %289 = vmatpush.msra.mxu0 0.0
    %290 = vmatpush.msra.mxu0 0.0
    %291 = vmatpush.msra.mxu0 0.0
    %292 = vmatpush.msra.mxu0 0.0
    %293 = vmatpush.msra.mxu0 0.0
    %294 = vmatpush.msra.mxu0 0.0
    %295 = vmatpush.msra.mxu0 0.0
    %296 = vmatpush.msra.mxu0 0.0
    %297 = vmatpush.msra.mxu0 0.0
    %298 = vmatpush.msra.mxu0 0.0
    %299 = vmatpush.msra.mxu0 0.0
    %300 = vmatpush.msra.mxu0 0.0
    %301 = vmatpush.msra.mxu0 0.0
    %302 = vmatpush.msra.mxu0 %v240
    %303 = vmatpush.msra.mxu0 %v239
    %304 = vmatmul.f32.gmra.mxu0 %v286
    %v305 = vpop.f32.mrf.mxu0
    %v306 = vadd.f32 0.0, %v305
    %307 = vdwg.mxu0
    %v308 = vadd.f32 %v204, %v306
    %v309 = vtanh.pop %v308
    %v310 = vmul.f32 %v309, %v254
    %v311 = vadd.f32 %v310, %v255
    %313 = vrot.lane.b32.xlu0 %v257, 16
    %v314 = vpop.permute.xlu0 %313
    %v316 = vmul.f32 %v311, %v314
    %318 = vrot.lane.b32.xlu0 %v311, 96
    %v319 = vpop.permute.xlu0 %318
    %v321 = vmul.f32 %v311, %v319
    %323 = vrot.lane.b32.xlu0 %v321, 16
    %v324 = vpop.permute.xlu0 %323
    %v326 = vadd.f32 %v316, %v324
    %v327 = vtanh.pop %v326
    %329 = vrot.lane.b32.xlu0 %v327, 32
    %v330 = vpop.permute.xlu0 %329
    %v332 = vmul.f32 %v311, %v330
    %334 = vrot.lane.b32.xlu0 %v332, 80
    %v335 = vpop.permute.xlu0 %334
    %v336 = vsel %vm101, %v335, 0
    %338 = vmatpush.msra.mxu0 0.0
    %339 = vmatpush.msra.mxu0 0.0
    %340 = vmatpush.msra.mxu0 0.0
    %341 = vmatpush.msra.mxu0 0.0
    %342 = vmatpush.msra.mxu0 0.0
    %343 = vmatpush.msra.mxu0 0.0
    %344 = vmatpush.msra.mxu0 0.0
    %345 = vmatpush.msra.mxu0 0.0
    %346 = vmatpush.msra.mxu0 0.0
    %347 = vmatpush.msra.mxu0 0.0
    %348 = vmatpush.msra.mxu0 0.0
    %349 = vmatpush.msra.mxu0 0.0
    %350 = vmatpush.msra.mxu0 0.0
    %351 = vmatpush.msra.mxu0 0.0
    %352 = vmatpush.msra.mxu0 %v242
    %353 = vmatpush.msra.mxu0 %v241
    %354 = vmatmul.f32.gmra.mxu0 %v336
    %v355 = vpop.f32.mrf.mxu0
    %v356 = vadd.f32 %v283, %v355
    %357 = vdwg.mxu0
    %v358 = vtanh.pop %v356
    %v359 = vmul.f32 %v358, %v254
    %v360 = vadd.f32 %v359, %v255
    %362 = vrot.lane.b32.xlu0 %v261, 16
    %v363 = vpop.permute.xlu0 %362
    %v365 = vmul.f32 %v360, %v363
    %367 = vrot.lane.b32.xlu0 %v360, 96
    %v368 = vpop.permute.xlu0 %367
    %v370 = vmul.f32 %v360, %v368
    %372 = vrot.lane.b32.xlu0 %v370, 16
    %v373 = vpop.permute.xlu0 %372
    %v375 = vadd.f32 %v365, %v373
    %v376 = vtanh.pop %v375
    %378 = vrot.lane.b32.xlu0 %v376, 32
    %v379 = vpop.permute.xlu0 %378
    %v381 = vmul.f32 %v360, %v379
    %383 = vrot.lane.b32.xlu0 %v381, 80
    %v384 = vpop.permute.xlu0 %383
    %v385 = vsel %vm101, %v384, 0
    %387 = vmatpush.msra.mxu0 0.0
    %388 = vmatpush.msra.mxu0 0.0
    %389 = vmatpush.msra.mxu0 0.0
    %390 = vmatpush.msra.mxu0 0.0
    %391 = vmatpush.msra.mxu0 0.0
    %392 = vmatpush.msra.mxu0 0.0
    %393 = vmatpush.msra.mxu0 0.0
    %394 = vmatpush.msra.mxu0 0.0
    %395 = vmatpush.msra.mxu0 0.0
    %396 = vmatpush.msra.mxu0 0.0
    %397 = vmatpush.msra.mxu0 0.0
    %398 = vmatpush.msra.mxu0 0.0
    %399 = vmatpush.msra.mxu0 0.0
    %400 = vmatpush.msra.mxu0 0.0
    %401 = vmatpush.msra.mxu0 %v244
    %402 = vmatpush.msra.mxu0 %v243
    %403 = vmatmul.f32.gmra.mxu0 %v385
    %v404 = vpop.f32.mrf.mxu0
    %v405 = vadd.f32 %v247, %v404
    %406 = vdwg.mxu0
    %407 = vmatpush.msra.mxu0 0.0
    %408 = vmatpush.msra.mxu0 0.0
    %409 = vmatpush.msra.mxu0 0.0
    %410 = vmatpush.msra.mxu0 0.0
    %411 = vmatpush.msra.mxu0 0.0
    %412 = vmatpush.msra.mxu0 0.0
    %413 = vmatpush.msra.mxu0 0.0
    %414 = vmatpush.msra.mxu0 0.0
    %415 = vmatpush.msra.mxu0 0.0
    %416 = vmatpush.msra.mxu0 0.0
    %417 = vmatpush.msra.mxu0 0.0
    %418 = vmatpush.msra.mxu0 0.0
    %419 = vmatpush.msra.mxu0 0.0
    %420 = vmatpush.msra.mxu0 0.0
    %421 = vmatpush.msra.mxu0 %v240
    %422 = vmatpush.msra.mxu0 %v239
    %423 = vmatmul.f32.gmra.mxu0 %v336
    %v424 = vpop.f32.mrf.mxu0
    %v425 = vadd.f32 0.0, %v424
    %426 = vdwg.mxu0
    %v427 = vadd.f32 %v208, %v425
    %v428 = vtanh.pop %v427
    %v429 = vmul.f32 %v428, %v254
    %v430 = vadd.f32 %v429, %v255
    %v431 = vmul.f32 %v430, %v326
    %433 = vrot.lane.b32.xlu0 %v430, 96
    %v434 = vpop.permute.xlu0 %433
    %v436 = vmul.f32 %v430, %v434
    %438 = vrot.lane.b32.xlu0 %v436, 16
    %v439 = vpop.permute.xlu0 %438
    %v441 = vadd.f32 %v431, %v439
    %v442 = vtanh.pop %v441
    %444 = vrot.lane.b32.xlu0 %v442, 32
    %v445 = vpop.permute.xlu0 %444
    %v447 = vmul.f32 %v430, %v445
    %449 = vrot.lane.b32.xlu0 %v447, 80
    %v450 = vpop.permute.xlu0 %449
    %v451 = vsel %vm101, %v450, 0
    %453 = vmatpush.msra.mxu0 0.0
    %454 = vmatpush.msra.mxu0 0.0
    %455 = vmatpush.msra.mxu0 0.0
    %456 = vmatpush.msra.mxu0 0.0
    %457 = vmatpush.msra.mxu0 0.0
    %458 = vmatpush.msra.mxu0 0.0
    %459 = vmatpush.msra.mxu0 0.0
    %460 = vmatpush.msra.mxu0 0.0
    %461 = vmatpush.msra.mxu0 0.0
    %462 = vmatpush.msra.mxu0 0.0
    %463 = vmatpush.msra.mxu0 0.0
    %464 = vmatpush.msra.mxu0 0.0
    %465 = vmatpush.msra.mxu0 0.0
    %466 = vmatpush.msra.mxu0 0.0
    %467 = vmatpush.msra.mxu0 %v242
    %468 = vmatpush.msra.mxu0 %v241
    %469 = vmatmul.f32.gmra.mxu0 %v451
    %v470 = vpop.f32.mrf.mxu0
    %v471 = vadd.f32 %v405, %v470
    %472 = vdwg.mxu0
    %v473 = vtanh.pop %v471
    %v474 = vmul.f32 %v473, %v254
    %v475 = vadd.f32 %v474, %v255
    %v476 = vmul.f32 %v475, %v375
    %478 = vrot.lane.b32.xlu0 %v475, 96
    %v479 = vpop.permute.xlu0 %478
    %v481 = vmul.f32 %v475, %v479
    %483 = vrot.lane.b32.xlu0 %v481, 16
    %v484 = vpop.permute.xlu0 %483
    %v486 = vadd.f32 %v476, %v484
    %v487 = vtanh.pop %v486
    %489 = vrot.lane.b32.xlu0 %v487, 32
    %v490 = vpop.permute.xlu0 %489
    %v492 = vmul.f32 %v475, %v490
    %494 = vrot.lane.b32.xlu0 %v492, 80
    %v495 = vpop.permute.xlu0 %494
    %v496 = vsel %vm101, %v495, 0
    %498 = vmatpush.msra.mxu0 0.0
    %499 = vmatpush.msra.mxu0 0.0
    %500 = vmatpush.msra.mxu0 0.0
    %501 = vmatpush.msra.mxu0 0.0
    %502 = vmatpush.msra.mxu0 0.0
    %503 = vmatpush.msra.mxu0 0.0
    %504 = vmatpush.msra.mxu0 0.0
    %505 = vmatpush.msra.mxu0 0.0
    %506 = vmatpush.msra.mxu0 0.0
    %507 = vmatpush.msra.mxu0 0.0
    %508 = vmatpush.msra.mxu0 0.0
    %509 = vmatpush.msra.mxu0 0.0
    %510 = vmatpush.msra.mxu0 0.0
    %511 = vmatpush.msra.mxu0 0.0
    %512 = vmatpush.msra.mxu0 %v244
    %513 = vmatpush.msra.mxu0 %v243
    %514 = vmatmul.f32.gmra.mxu0 %v496
    %v515 = vpop.f32.mrf.mxu0
    %v516 = vadd.f32 %v247, %v515
    %517 = vdwg.mxu0
    %518 = vmatpush.msra.mxu0 0.0
    %519 = vmatpush.msra.mxu0 0.0
    %520 = vmatpush.msra.mxu0 0.0
    %521 = vmatpush.msra.mxu0 0.0
    %522 = vmatpush.msra.mxu0 0.0
    %523 = vmatpush.msra.mxu0 0.0
    %524 = vmatpush.msra.mxu0 0.0
    %525 = vmatpush.msra.mxu0 0.0
    %526 = vmatpush.msra.mxu0 0.0
    %527 = vmatpush.msra.mxu0 0.0
    %528 = vmatpush.msra.mxu0 0.0
    %529 = vmatpush.msra.mxu0 0.0
    %530 = vmatpush.msra.mxu0 0.0
    %531 = vmatpush.msra.mxu0 0.0
    %532 = vmatpush.msra.mxu0 %v240
    %533 = vmatpush.msra.mxu0 %v239
    %534 = vmatmul.f32.gmra.mxu0 %v451
    %v535 = vpop.f32.mrf.mxu0
    %v536 = vadd.f32 0.0, %v535
    %537 = vdwg.mxu0
    %v538 = vadd.f32 %v213, %v536
    %v539 = vtanh.pop %v538
    %v540 = vmul.f32 %v539, %v254
    %v541 = vadd.f32 %v540, %v255
    %v542 = vmul.f32 %v541, %v441
    %544 = vrot.lane.b32.xlu0 %v541, 96
    %v545 = vpop.permute.xlu0 %544
    %v547 = vmul.f32 %v541, %v545
    %549 = vrot.lane.b32.xlu0 %v547, 16
    %v550 = vpop.permute.xlu0 %549
    %v552 = vadd.f32 %v542, %v550
    %v553 = vtanh.pop %v552
    %555 = vrot.lane.b32.xlu0 %v553, 32
    %v556 = vpop.permute.xlu0 %555
    %v558 = vmul.f32 %v541, %v556
    %560 = vrot.lane.b32.xlu0 %v558, 80
    %v561 = vpop.permute.xlu0 %560
    %v562 = vsel %vm101, %v561, 0
    %564 = vmatpush.msra.mxu0 0.0
    %565 = vmatpush.msra.mxu0 0.0
    %566 = vmatpush.msra.mxu0 0.0
    %567 = vmatpush.msra.mxu0 0.0
    %568 = vmatpush.msra.mxu0 0.0
    %569 = vmatpush.msra.mxu0 0.0
    %570 = vmatpush.msra.mxu0 0.0
    %571 = vmatpush.msra.mxu0 0.0
    %572 = vmatpush.msra.mxu0 0.0
    %573 = vmatpush.msra.mxu0 0.0
    %574 = vmatpush.msra.mxu0 0.0
    %575 = vmatpush.msra.mxu0 0.0
    %576 = vmatpush.msra.mxu0 0.0
    %577 = vmatpush.msra.mxu0 0.0
    %578 = vmatpush.msra.mxu0 %v242
    %579 = vmatpush.msra.mxu0 %v241
    %580 = vmatmul.f32.gmra.mxu0 %v562
    %v581 = vpop.f32.mrf.mxu0
    %v582 = vadd.f32 %v516, %v581
    %583 = vdwg.mxu0
    %v584 = vtanh.pop %v582
    %v585 = vmul.f32 %v584, %v254
    %v586 = vadd.f32 %v585, %v255
    %v587 = vmul.f32 %v586, %v486
    %589 = vrot.lane.b32.xlu0 %v586, 96
    %v590 = vpop.permute.xlu0 %589
    %v592 = vmul.f32 %v586, %v590
    %594 = vrot.lane.b32.xlu0 %v592, 16
    %v595 = vpop.permute.xlu0 %594
    %v597 = vadd.f32 %v587, %v595
    %v598 = vtanh.pop %v597
    %600 = vrot.lane.b32.xlu0 %v598, 32
    %v601 = vpop.permute.xlu0 %600
    %v603 = vmul.f32 %v586, %v601
    %605 = vrot.lane.b32.xlu0 %v603, 80
    %v606 = vpop.permute.xlu0 %605
    %v607 = vsel %vm101, %v606, 0
    %609 = vmatpush.msra.mxu0 0.0
    %610 = vmatpush.msra.mxu0 0.0
    %611 = vmatpush.msra.mxu0 0.0
    %612 = vmatpush.msra.mxu0 0.0
    %613 = vmatpush.msra.mxu0 0.0
    %614 = vmatpush.msra.mxu0 0.0
    %615 = vmatpush.msra.mxu0 0.0
    %616 = vmatpush.msra.mxu0 0.0
    %617 = vmatpush.msra.mxu0 0.0
    %618 = vmatpush.msra.mxu0 0.0
    %619 = vmatpush.msra.mxu0 0.0
    %620 = vmatpush.msra.mxu0 0.0
    %621 = vmatpush.msra.mxu0 0.0
    %622 = vmatpush.msra.mxu0 0.0
    %623 = vmatpush.msra.mxu0 %v244
    %624 = vmatpush.msra.mxu0 %v243
    %625 = vmatmul.f32.gmra.mxu0 %v607
    %v626 = vpop.f32.mrf.mxu0
    %v627 = vadd.f32 %v247, %v626
    %628 = vdwg.mxu0
    %629 = vmatpush.msra.mxu0 0.0
    %630 = vmatpush.msra.mxu0 0.0
    %631 = vmatpush.msra.mxu0 0.0
    %632 = vmatpush.msra.mxu0 0.0
    %633 = vmatpush.msra.mxu0 0.0
    %634 = vmatpush.msra.mxu0 0.0
    %635 = vmatpush.msra.mxu0 0.0
    %636 = vmatpush.msra.mxu0 0.0
    %637 = vmatpush.msra.mxu0 0.0
    %638 = vmatpush.msra.mxu0 0.0
    %639 = vmatpush.msra.mxu0 0.0
    %640 = vmatpush.msra.mxu0 0.0
    %641 = vmatpush.msra.mxu0 0.0
    %642 = vmatpush.msra.mxu0 0.0
    %643 = vmatpush.msra.mxu0 %v240
    %644 = vmatpush.msra.mxu0 %v239
    %645 = vmatmul.f32.gmra.mxu0 %v562
    %v646 = vpop.f32.mrf.mxu0
    %v647 = vadd.f32 0.0, %v646
    %648 = vdwg.mxu0
    %v649 = vadd.f32 %v218, %v647
    %v650 = vtanh.pop %v649
    %v651 = vmul.f32 %v650, %v254
    %v652 = vadd.f32 %v651, %v255
    %v653 = vmul.f32 %v652, %v552
    %655 = vrot.lane.b32.xlu0 %v652, 96
    %v656 = vpop.permute.xlu0 %655
    %v658 = vmul.f32 %v652, %v656
    %660 = vrot.lane.b32.xlu0 %v658, 16
    %v661 = vpop.permute.xlu0 %660
    %v663 = vadd.f32 %v653, %v661
    %v664 = vtanh.pop %v663
    %666 = vrot.lane.b32.xlu0 %v664, 32
    %v667 = vpop.permute.xlu0 %666
    %v669 = vmul.f32 %v652, %v667
    %671 = vrot.lane.b32.xlu0 %v669, 80
    %v672 = vpop.permute.xlu0 %671
    %v673 = vsel %vm101, %v672, 0
    %675 = vmatpush.msra.mxu0 0.0
    %676 = vmatpush.msra.mxu0 0.0
    %677 = vmatpush.msra.mxu0 0.0
    %678 = vmatpush.msra.mxu0 0.0
    %679 = vmatpush.msra.mxu0 0.0
    %680 = vmatpush.msra.mxu0 0.0
    %681 = vmatpush.msra.mxu0 0.0
    %682 = vmatpush.msra.mxu0 0.0
    %683 = vmatpush.msra.mxu0 0.0
    %684 = vmatpush.msra.mxu0 0.0
    %685 = vmatpush.msra.mxu0 0.0
    %686 = vmatpush.msra.mxu0 0.0
    %687 = vmatpush.msra.mxu0 0.0
    %688 = vmatpush.msra.mxu0 0.0
    %689 = vmatpush.msra.mxu0 %v242
    %690 = vmatpush.msra.mxu0 %v241
    %691 = vmatmul.f32.gmra.mxu0 %v673
    %v692 = vpop.f32.mrf.mxu0
    %v693 = vadd.f32 %v627, %v692
    %694 = vdwg.mxu0
    %v695 = vtanh.pop %v693
    %v696 = vmul.f32 %v695, %v254
    %v697 = vadd.f32 %v696, %v255
    %v698 = vmul.f32 %v697, %v597
    %700 = vrot.lane.b32.xlu0 %v697, 96
    %v701 = vpop.permute.xlu0 %700
    %v703 = vmul.f32 %v697, %v701
    %705 = vrot.lane.b32.xlu0 %v703, 16
    %v706 = vpop.permute.xlu0 %705
    %v708 = vadd.f32 %v698, %v706
    %v709 = vtanh.pop %v708
    %711 = vrot.lane.b32.xlu0 %v709, 32
    %v712 = vpop.permute.xlu0 %711
    %v714 = vmul.f32 %v697, %v712
    %716 = vrot.lane.b32.xlu0 %v714, 80
    %v717 = vpop.permute.xlu0 %716
    %v718 = vsel %vm101, %v717, 0
    %720 = vmatpush.msra.mxu0 0.0
    %721 = vmatpush.msra.mxu0 0.0
    %722 = vmatpush.msra.mxu0 0.0
    %723 = vmatpush.msra.mxu0 0.0
    %724 = vmatpush.msra.mxu0 0.0
    %725 = vmatpush.msra.mxu0 0.0
    %726 = vmatpush.msra.mxu0 0.0
    %727 = vmatpush.msra.mxu0 0.0
    %728 = vmatpush.msra.mxu0 0.0
    %729 = vmatpush.msra.mxu0 0.0
    %730 = vmatpush.msra.mxu0 0.0
    %731 = vmatpush.msra.mxu0 0.0
    %732 = vmatpush.msra.mxu0 0.0
    %733 = vmatpush.msra.mxu0 0.0
    %734 = vmatpush.msra.mxu0 %v244
    %735 = vmatpush.msra.mxu0 %v243
    %736 = vmatmul.f32.gmra.mxu0 %v718
    %v737 = vpop.f32.mrf.mxu0
    %v738 = vadd.f32 %v247, %v737
    %739 = vdwg.mxu0
    %740 = vmatpush.msra.mxu0 0.0
    %741 = vmatpush.msra.mxu0 0.0
    %742 = vmatpush.msra.mxu0 0.0
    %743 = vmatpush.msra.mxu0 0.0
    %744 = vmatpush.msra.mxu0 0.0
    %745 = vmatpush.msra.mxu0 0.0
    %746 = vmatpush.msra.mxu0 0.0
    %747 = vmatpush.msra.mxu0 0.0
    %748 = vmatpush.msra.mxu0 0.0
    %749 = vmatpush.msra.mxu0 0.0
    %750 = vmatpush.msra.mxu0 0.0
    %751 = vmatpush.msra.mxu0 0.0
    %752 = vmatpush.msra.mxu0 0.0
    %753 = vmatpush.msra.mxu0 0.0
    %754 = vmatpush.msra.mxu0 %v240
    %755 = vmatpush.msra.mxu0 %v239
    %756 = vmatmul.f32.gmra.mxu0 %v673
    %v757 = vpop.f32.mrf.mxu0
    %v758 = vadd.f32 0.0, %v757
    %759 = vdwg.mxu0
    %v760 = vadd.f32 %v223, %v758
    %v761 = vtanh.pop %v760
    %v762 = vmul.f32 %v761, %v254
    %v763 = vadd.f32 %v762, %v255
    %v764 = vmul.f32 %v763, %v663
    %766 = vrot.lane.b32.xlu0 %v763, 96
    %v767 = vpop.permute.xlu0 %766
    %v769 = vmul.f32 %v763, %v767
    %771 = vrot.lane.b32.xlu0 %v769, 16
    %v772 = vpop.permute.xlu0 %771
    %v774 = vadd.f32 %v764, %v772
    %v775 = vtanh.pop %v774
    %777 = vrot.lane.b32.xlu0 %v775, 32
    %v778 = vpop.permute.xlu0 %777
    %v780 = vmul.f32 %v763, %v778
    %782 = vrot.lane.b32.xlu0 %v780, 80
    %v783 = vpop.permute.xlu0 %782
    %v784 = vsel %vm101, %v783, 0
    %786 = vmatpush.msra.mxu0 0.0
    %787 = vmatpush.msra.mxu0 0.0
    %788 = vmatpush.msra.mxu0 0.0
    %789 = vmatpush.msra.mxu0 0.0
    %790 = vmatpush.msra.mxu0 0.0
    %791 = vmatpush.msra.mxu0 0.0
    %792 = vmatpush.msra.mxu0 0.0
    %793 = vmatpush.msra.mxu0 0.0
    %794 = vmatpush.msra.mxu0 0.0
    %795 = vmatpush.msra.mxu0 0.0
    %796 = vmatpush.msra.mxu0 0.0
    %797 = vmatpush.msra.mxu0 0.0
    %798 = vmatpush.msra.mxu0 0.0
    %799 = vmatpush.msra.mxu0 0.0
    %800 = vmatpush.msra.mxu0 %v242
    %801 = vmatpush.msra.mxu0 %v241
    %802 = vmatmul.f32.gmra.mxu0 %v784
    %v803 = vpop.f32.mrf.mxu0
    %v804 = vadd.f32 %v738, %v803
    %805 = vdwg.mxu0
    %v806 = vtanh.pop %v804
    %v807 = vmul.f32 %v806, %v254
    %v808 = vadd.f32 %v807, %v255
    %v809 = vmul.f32 %v808, %v708
    %811 = vrot.lane.b32.xlu0 %v808, 96
    %v812 = vpop.permute.xlu0 %811
    %v814 = vmul.f32 %v808, %v812
    %816 = vrot.lane.b32.xlu0 %v814, 16
    %v817 = vpop.permute.xlu0 %816
    %v819 = vadd.f32 %v809, %v817
    %v820 = vtanh.pop %v819
    %822 = vrot.lane.b32.xlu0 %v820, 32
    %v823 = vpop.permute.xlu0 %822
    %v825 = vmul.f32 %v808, %v823
    %827 = vrot.lane.b32.xlu0 %v825, 80
    %v828 = vpop.permute.xlu0 %827
    %v829 = vsel %vm101, %v828, 0
    %831 = vmatpush.msra.mxu0 0.0
    %832 = vmatpush.msra.mxu0 0.0
    %833 = vmatpush.msra.mxu0 0.0
    %834 = vmatpush.msra.mxu0 0.0
    %835 = vmatpush.msra.mxu0 0.0
    %836 = vmatpush.msra.mxu0 0.0
    %837 = vmatpush.msra.mxu0 0.0
    %838 = vmatpush.msra.mxu0 0.0
    %839 = vmatpush.msra.mxu0 0.0
    %840 = vmatpush.msra.mxu0 0.0
    %841 = vmatpush.msra.mxu0 0.0
    %842 = vmatpush.msra.mxu0 0.0
    %843 = vmatpush.msra.mxu0 0.0
    %844 = vmatpush.msra.mxu0 0.0
    %845 = vmatpush.msra.mxu0 %v244
    %846 = vmatpush.msra.mxu0 %v243
    %847 = vmatmul.f32.gmra.mxu0 %v829
    %v848 = vpop.f32.mrf.mxu0
    %v849 = vadd.f32 %v247, %v848
    %850 = vdwg.mxu0
    %851 = vmatpush.msra.mxu0 0.0
    %852 = vmatpush.msra.mxu0 0.0
    %853 = vmatpush.msra.mxu0 0.0
    %854 = vmatpush.msra.mxu0 0.0
    %855 = vmatpush.msra.mxu0 0.0
    %856 = vmatpush.msra.mxu0 0.0
    %857 = vmatpush.msra.mxu0 0.0
    %858 = vmatpush.msra.mxu0 0.0
    %859 = vmatpush.msra.mxu0 0.0
    %860 = vmatpush.msra.mxu0 0.0
    %861 = vmatpush.msra.mxu0 0.0
    %862 = vmatpush.msra.mxu0 0.0
    %863 = vmatpush.msra.mxu0 0.0
    %864 = vmatpush.msra.mxu0 0.0
    %865 = vmatpush.msra.mxu0 %v240
    %866 = vmatpush.msra.mxu0 %v239
    %867 = vmatmul.f32.gmra.mxu0 %v784
    %v868 = vpop.f32.mrf.mxu0
    %v869 = vadd.f32 0.0, %v868
    %870 = vdwg.mxu0
    %v871 = vadd.f32 %v228, %v869
    %v872 = vtanh.pop %v871
    %v873 = vmul.f32 %v872, %v254
    %v874 = vadd.f32 %v873, %v255
    %v875 = vmul.f32 %v874, %v774
    %877 = vrot.lane.b32.xlu0 %v874, 96
    %v878 = vpop.permute.xlu0 %877
    %v880 = vmul.f32 %v874, %v878
    %882 = vrot.lane.b32.xlu0 %v880, 16
    %v883 = vpop.permute.xlu0 %882
    %v885 = vadd.f32 %v875, %v883
    %v886 = vtanh.pop %v885
    %888 = vrot.lane.b32.xlu0 %v886, 32
    %v889 = vpop.permute.xlu0 %888
    %v891 = vmul.f32 %v874, %v889
    %893 = vrot.lane.b32.xlu0 %v891, 80
    %v894 = vpop.permute.xlu0 %893
    %v895 = vsel %vm101, %v894, 0
    %897 = vmatpush.msra.mxu0 0.0
    %898 = vmatpush.msra.mxu0 0.0
    %899 = vmatpush.msra.mxu0 0.0
    %900 = vmatpush.msra.mxu0 0.0
    %901 = vmatpush.msra.mxu0 0.0
    %902 = vmatpush.msra.mxu0 0.0
    %903 = vmatpush.msra.mxu0 0.0
    %904 = vmatpush.msra.mxu0 0.0
    %905 = vmatpush.msra.mxu0 0.0
    %906 = vmatpush.msra.mxu0 0.0
    %907 = vmatpush.msra.mxu0 0.0
    %908 = vmatpush.msra.mxu0 0.0
    %909 = vmatpush.msra.mxu0 0.0
    %910 = vmatpush.msra.mxu0 0.0
    %911 = vmatpush.msra.mxu0 %v242
    %912 = vmatpush.msra.mxu0 %v241
    %913 = vmatmul.f32.gmra.mxu0 %v895
    %v914 = vpop.f32.mrf.mxu0
    %v915 = vadd.f32 %v849, %v914
    %916 = vdwg.mxu0
    %v917 = vtanh.pop %v915
    %v918 = vmul.f32 %v917, %v254
    %v919 = vadd.f32 %v918, %v255
    %v920 = vmul.f32 %v919, %v819
    %922 = vrot.lane.b32.xlu0 %v919, 96
    %v923 = vpop.permute.xlu0 %922
    %v925 = vmul.f32 %v919, %v923
    %927 = vrot.lane.b32.xlu0 %v925, 16
    %v928 = vpop.permute.xlu0 %927
    %v930 = vadd.f32 %v920, %v928
    %v931 = vtanh.pop %v930
    %933 = vrot.lane.b32.xlu0 %v931, 32
    %v934 = vpop.permute.xlu0 %933
    %v936 = vmul.f32 %v919, %v934
    %938 = vrot.lane.b32.xlu0 %v936, 80
    %v939 = vpop.permute.xlu0 %938
    %v940 = vsel %vm101, %v939, 0
    %942 = vmatpush.msra.mxu0 0.0
    %943 = vmatpush.msra.mxu0 0.0
    %944 = vmatpush.msra.mxu0 0.0
    %945 = vmatpush.msra.mxu0 0.0
    %946 = vmatpush.msra.mxu0 0.0
    %947 = vmatpush.msra.mxu0 0.0
    %948 = vmatpush.msra.mxu0 0.0
    %949 = vmatpush.msra.mxu0 0.0
    %950 = vmatpush.msra.mxu0 0.0
    %951 = vmatpush.msra.mxu0 0.0
    %952 = vmatpush.msra.mxu0 0.0
    %953 = vmatpush.msra.mxu0 0.0
    %954 = vmatpush.msra.mxu0 0.0
    %955 = vmatpush.msra.mxu0 0.0
    %956 = vmatpush.msra.mxu0 %v244
    %957 = vmatpush.msra.mxu0 %v243
    %958 = vmatmul.f32.gmra.mxu0 %v940
    %v959 = vpop.f32.mrf.mxu0
    %v960 = vadd.f32 %v247, %v959
    %961 = vdwg.mxu0
    %962 = vmatpush.msra.mxu0 0.0
    %963 = vmatpush.msra.mxu0 0.0
    %964 = vmatpush.msra.mxu0 0.0
    %965 = vmatpush.msra.mxu0 0.0
    %966 = vmatpush.msra.mxu0 0.0
    %967 = vmatpush.msra.mxu0 0.0
    %968 = vmatpush.msra.mxu0 0.0
    %969 = vmatpush.msra.mxu0 0.0
    %970 = vmatpush.msra.mxu0 0.0
    %971 = vmatpush.msra.mxu0 0.0
    %972 = vmatpush.msra.mxu0 0.0
    %973 = vmatpush.msra.mxu0 0.0
    %974 = vmatpush.msra.mxu0 0.0
    %975 = vmatpush.msra.mxu0 0.0
    %976 = vmatpush.msra.mxu0 %v240
    %977 = vmatpush.msra.mxu0 %v239
    %978 = vmatmul.f32.gmra.mxu0 %v895
    %v979 = vpop.f32.mrf.mxu0
    %v980 = vadd.f32 0.0, %v979
    %981 = vdwg.mxu0
    %v982 = vadd.f32 %v233, %v980
    %v983 = vtanh.pop %v982
    %v984 = vmul.f32 %v983, %v254
    %v985 = vadd.f32 %v984, %v255
    %v986 = vmul.f32 %v985, %v885
    %988 = vrot.lane.b32.xlu0 %v985, 96
    %v989 = vpop.permute.xlu0 %988
    %v991 = vmul.f32 %v985, %v989
    %993 = vrot.lane.b32.xlu0 %v991, 16
    %v994 = vpop.permute.xlu0 %993
    %v996 = vadd.f32 %v986, %v994
    %v997 = vtanh.pop %v996
    %999 = vrot.lane.b32.xlu0 %v997, 32
    %v1000 = vpop.permute.xlu0 %999
    %v1002 = vmul.f32 %v985, %v1000
    %1004 = vrot.lane.b32.xlu0 %v1002, 80
    %v1005 = vpop.permute.xlu0 %1004
    %v1006 = vsel %vm101, %v1005, 0
    %1008 = vmatpush.msra.mxu0 0.0
    %1009 = vmatpush.msra.mxu0 0.0
    %1010 = vmatpush.msra.mxu0 0.0
    %1011 = vmatpush.msra.mxu0 0.0
    %1012 = vmatpush.msra.mxu0 0.0
    %1013 = vmatpush.msra.mxu0 0.0
    %1014 = vmatpush.msra.mxu0 0.0
    %1015 = vmatpush.msra.mxu0 0.0
    %1016 = vmatpush.msra.mxu0 0.0
    %1017 = vmatpush.msra.mxu0 0.0
    %1018 = vmatpush.msra.mxu0 0.0
    %1019 = vmatpush.msra.mxu0 0.0
    %1020 = vmatpush.msra.mxu0 0.0
    %1021 = vmatpush.msra.mxu0 0.0
    %1022 = vmatpush.msra.mxu0 %v242
    %1023 = vmatpush.msra.mxu0 %v241
    %1024 = vmatmul.f32.gmra.mxu0 %v1006
    %v1025 = vpop.f32.mrf.mxu0
    %v1026 = vadd.f32 %v960, %v1025
    %1027 = vdwg.mxu0
    %v1028 = vtanh.pop %v1026
    %v1029 = vmul.f32 %v1028, %v254
    %v1030 = vadd.f32 %v1029, %v255
    %v1031 = vmul.f32 %v1030, %v930
    %1033 = vrot.lane.b32.xlu0 %v1030, 96
    %v1034 = vpop.permute.xlu0 %1033
    %v1036 = vmul.f32 %v1030, %v1034
    %1038 = vrot.lane.b32.xlu0 %v1036, 16
    %v1039 = vpop.permute.xlu0 %1038
    %v1041 = vadd.f32 %v1031, %v1039
    %v1042 = vtanh.pop %v1041
    %1044 = vrot.lane.b32.xlu0 %v1042, 32
    %v1045 = vpop.permute.xlu0 %1044
    %v1047 = vmul.f32 %v1030, %v1045
    %1049 = vrot.lane.b32.xlu0 %v1047, 80
    %v1050 = vpop.permute.xlu0 %1049
    %v1051 = vsel %vm101, %v1050, 0
    %1053 = vmatpush.msra.mxu0 0.0
    %1054 = vmatpush.msra.mxu0 0.0
    %1055 = vmatpush.msra.mxu0 0.0
    %1056 = vmatpush.msra.mxu0 0.0
    %1057 = vmatpush.msra.mxu0 0.0
    %1058 = vmatpush.msra.mxu0 0.0
    %1059 = vmatpush.msra.mxu0 0.0
    %1060 = vmatpush.msra.mxu0 0.0
    %1061 = vmatpush.msra.mxu0 0.0
    %1062 = vmatpush.msra.mxu0 0.0
    %1063 = vmatpush.msra.mxu0 0.0
    %1064 = vmatpush.msra.mxu0 0.0
    %1065 = vmatpush.msra.mxu0 0.0
    %1066 = vmatpush.msra.mxu0 0.0
    %1067 = vmatpush.msra.mxu0 %v244
    %1068 = vmatpush.msra.mxu0 %v243
    %1069 = vmatmul.f32.gmra.mxu0 %v1051
    %v1070 = vpop.f32.mrf.mxu0
    %v1071 = vadd.f32 %v247, %v1070
    %1072 = vdwg.mxu0
    %1073 = vmatpush.msra.mxu0 0.0
    %1074 = vmatpush.msra.mxu0 0.0
    %1075 = vmatpush.msra.mxu0 0.0
    %1076 = vmatpush.msra.mxu0 0.0
    %1077 = vmatpush.msra.mxu0 0.0
    %1078 = vmatpush.msra.mxu0 0.0
    %1079 = vmatpush.msra.mxu0 0.0
    %1080 = vmatpush.msra.mxu0 0.0
    %1081 = vmatpush.msra.mxu0 0.0
    %1082 = vmatpush.msra.mxu0 0.0
    %1083 = vmatpush.msra.mxu0 0.0
    %1084 = vmatpush.msra.mxu0 0.0
    %1085 = vmatpush.msra.mxu0 0.0
    %1086 = vmatpush.msra.mxu0 0.0
    %1087 = vmatpush.msra.mxu0 %v240
    %1088 = vmatpush.msra.mxu0 %v239
    %1089 = vmatmul.f32.gmra.mxu0 %v1006
    %v1090 = vpop.f32.mrf.mxu0
    %v1091 = vadd.f32 0.0, %v1090
    %1092 = vdwg.mxu0
    %v1093 = vadd.f32 %v238, %v1091
    %v1094 = vtanh.pop %v1093
    %v1095 = vmul.f32 %v1094, %v254
    %v1096 = vadd.f32 %v1095, %v255
    %v1097 = vmul.f32 %v1096, %v996
    %1099 = vrot.lane.b32.xlu0 %v1096, 96
    %v1100 = vpop.permute.xlu0 %1099
    %v1102 = vmul.f32 %v1096, %v1100
    %1104 = vrot.lane.b32.xlu0 %v1102, 16
    %v1105 = vpop.permute.xlu0 %1104
    %v1107 = vadd.f32 %v1097, %v1105
    %v1108 = vtanh.pop %v1107
    %1110 = vrot.lane.b32.xlu0 %v1108, 32
    %v1111 = vpop.permute.xlu0 %1110
    %v1113 = vmul.f32 %v1096, %v1111
    %1115 = vrot.lane.b32.xlu0 %v1113, 80
    %v1116 = vpop.permute.xlu0 %1115
    %v1117 = vsel %vm101, %v1116, 0
    %1119 = vmatpush.msra.mxu0 0.0
    %1120 = vmatpush.msra.mxu0 0.0
    %1121 = vmatpush.msra.mxu0 0.0
    %1122 = vmatpush.msra.mxu0 0.0
    %1123 = vmatpush.msra.mxu0 0.0
    %1124 = vmatpush.msra.mxu0 0.0
    %1125 = vmatpush.msra.mxu0 0.0
    %1126 = vmatpush.msra.mxu0 0.0
    %1127 = vmatpush.msra.mxu0 0.0
    %1128 = vmatpush.msra.mxu0 0.0
    %1129 = vmatpush.msra.mxu0 0.0
    %1130 = vmatpush.msra.mxu0 0.0
    %1131 = vmatpush.msra.mxu0 0.0
    %1132 = vmatpush.msra.mxu0 0.0
    %1133 = vmatpush.msra.mxu0 %v242
    %1134 = vmatpush.msra.mxu0 %v241
    %1135 = vmatmul.f32.gmra.mxu0 %v1117
    %v1136 = vpop.f32.mrf.mxu0
    %v1137 = vadd.f32 %v1071, %v1136
    %1138 = vdwg.mxu0
    %v1139 = vtanh.pop %v1137
    %v1140 = vmul.f32 %v1139, %v254
    %v1141 = vadd.f32 %v1140, %v255
    %v1142 = vmul.f32 %v1141, %v1041
    %1144 = vrot.lane.b32.xlu0 %v1141, 96
    %v1145 = vpop.permute.xlu0 %1144
    %v1147 = vmul.f32 %v1141, %v1145
    %1149 = vrot.lane.b32.xlu0 %v1147, 16
    %v1150 = vpop.permute.xlu0 %1149
    %v1152 = vadd.f32 %v1142, %v1150
    %v1153 = vtanh.pop %v1152
    %1155 = vrot.lane.b32.xlu0 %v1153, 32
    %v1156 = vpop.permute.xlu0 %1155
    %v1158 = vmul.f32 %v1141, %v1156
    %v1159 = vld [vmem:[%s9] sm:$0xff]
    %v1160 = vld [vmem:[%s9 + $0x8] sm:$0xff]
    %v1161 = vld [vmem:[%s10] sm:$0x1]
    %v1163 = vperm.slane %v1161, 0
    %1166 = vrot.lane.b32.xlu0 %v1158, 80
    %v1167 = vpop.permute.xlu0 %1166
    %v1168 = vsel %vm101, %v1167, 0
    %1170 = vmatpush.msra.mxu0 0.0
    %1171 = vmatpush.msra.mxu0 0.0
    %1172 = vmatpush.msra.mxu0 0.0
    %1173 = vmatpush.msra.mxu0 0.0
    %1174 = vmatpush.msra.mxu0 0.0
    %1175 = vmatpush.msra.mxu0 0.0
    %1176 = vmatpush.msra.mxu0 0.0
    %1177 = vmatpush.msra.mxu0 0.0
    %1178 = vmatpush.msra.mxu0 0.0
    %1179 = vmatpush.msra.mxu0 0.0
    %1180 = vmatpush.msra.mxu0 0.0
    %1181 = vmatpush.msra.mxu0 0.0
    %1182 = vmatpush.msra.mxu0 0.0
    %1183 = vmatpush.msra.mxu0 0.0
    %1184 = vmatpush.msra.mxu0 %v1160
    %1185 = vmatpush.msra.mxu0 %v1159
    %1186 = vmatmul.f32.gmra.mxu0 %v1168
    %v1187 = vpop.f32.mrf.mxu0
    %v1188 = vadd.f32 %v1163, %v1187
    %1189 = vdwg.mxu0
    %vm1190 = vcmask 41984
    %1191 = vst.msk [vmem:[#allocation2] sm:$0x3] %vm1190, %v1188
    // Predicated region
    $region46: #{tpu_custom_call.1} parent=1 // pred_check
      _
    $region47: #{tpu_custom_call.1} parent=1 // pred_check_branch
      %1193 = sbr.rel (0) target = $region49
    $region48: #{tpu_custom_call.1} parent=1 // pred_region
      %1195 = vsyncadd [#allocation3], 0
      %s1197 = sshll.u32 [#allocation2], 4
      %s1198 = int_to_ptr.vmem [resolvable:$true] %s1197
      %s1199 = sshll.u32 %s11, 4
      %s1200 = int_to_ptr.hbm [resolvable:$true] %s1199
      %1202 = dma.vmem_to_hbm [thread:$0]  %s1198, 32, %s1200, [#allocation3]
    $region49: #{tpu_custom_call.1} parent=1 // pred_fallthru
      _
    // Predicated region
    $region50: #{tpu_custom_call.1} parent=1 // pred_check
      _
    $region51: #{tpu_custom_call.1} parent=1 // pred_check_branch
      %1204 = sbr.rel (0) target = $region53
    $region52: #{tpu_custom_call.1} parent=1 // pred_region
      %1206 = dma.done [#allocation3], 32
    $region53: #{tpu_custom_call.1} parent=1 // pred_fallthru
      _
    %1207 = vsyncpa [#allocation3], 1

</llo_original>
